<compile_context>
chip_gen: v7x
topology: tpu7x:2x2x1
jax: 0.10.0
libtpu: 0.0.40
codegen_flags: <defaults>
</compile_context>

<pallas_src>
import jax
import jax.numpy as jnp
from jax import lax
from jax.experimental import pallas as pl
from jax.experimental.pallas import tpu as pltpu
import numpy as np


def _make_kernel(H, W):
    HW = H * W

    def kernel(x_ref, w1_ref, sel_ref, w3_ref, dw_ref, b1_ref, b3_ref, o_ref):
        # x_ref  : (B*2C, HW)  interleaved per batch: C rows of x1, then C rows of x2
        # w1_ref : (B*C, B*2C) block-diag 1x1 conv #1 (BN scale folded; reads x2 rows)
        # sel_ref: (B*C, B*2C) 0/1 row selection of the x1 rows (passthrough on MXU)
        # w3_ref : (B*C, B*C)  block-diag 1x1 conv #2 (BN scale folded)
        # dw_ref : (B*C, 9)    depthwise 3x3 taps (BN scale folded), tiled per batch
        # b1/b3  : (B*C, 1)    biases (b2 folded through conv #2 into b3)
        # o_ref  : (B*C, 2*HW) row (n,p): lanes [0,HW) = x1, [HW,2HW) = branch2
        x = x_ref[...].astype(jnp.float32)

        w1 = w1_ref[...]
        sel = sel_ref[...]
        w3 = w3_ref[...]
        dw = dw_ref[...]
        b1 = b1_ref[...]
        b3 = b3_ref[...]

        hi = lax.Precision.HIGHEST  # f32-accurate MXU passes (passthrough stays exact)

        # ---- x1 passthrough: row selection on the (otherwise idle) MXU ----
        x1 = jnp.dot(sel, x, precision=hi, preferred_element_type=jnp.float32)

        # ---- 1x1 conv + BN + ReLU (channel split folded into w1, MXU) ----
        h = jnp.dot(w1, x, precision=hi, preferred_element_type=jnp.float32)
        h = jnp.maximum(h + b1, 0.0)

        # ---- 3x3 depthwise conv (stride 1, pad 1) + folded BN scale ----
        # Spatial dims are flattened on the lane axis; a (di, dj) tap is a
        # cyclic lane roll (XLU) by di*W + dj.  Border handling:
        #   * W border: pre-zero the SOURCE column W-1 (dj=-1 taps) / column 0
        #     (dj=+1 taps) -> 2 selects, reused for all three row offsets.
        #   * H border (also covers roll wrap-around): zero the per-di partial
        #     sums on the first / last output row -> 2 selects.
        lane = lax.broadcasted_iota(jnp.int32, (1, HW), 1)
        col = lane % W
        h_m = jnp.where(col < (W - 1), h, 0.0)   # source for dj = -1 taps
        h_p = jnp.where(col > 0, h, 0.0)         # source for dj = +1 taps
        srcs = {-1: h_m, 0: h, 1: h_p}
        keep_up = lane < (HW - W)                # di = +1: drop last output row
        keep_dn = lane >= W                      # di = -1: drop first output row

        def tap_sum(di):
            total = None
            for dj in (-1, 0, 1):
                t = (di + 1) * 3 + (dj + 1)
                off = di * W + dj
                v = srcs[dj]
                if off != 0:
                    v = pltpu.roll(v, (-off) % HW, 1)
                contrib = v * dw[:, t:t + 1]
                total = contrib if total is None else total + contrib
            return total

        acc = (tap_sum(0)
               + jnp.where(keep_up, tap_sum(1), 0.0)
               + jnp.where(keep_dn, tap_sum(-1), 0.0))

        # ---- 1x1 conv + BN + ReLU (b2 already folded into b3, MXU) ----
        h3 = jnp.dot(w3, acc, precision=hi, preferred_element_type=jnp.float32)
        h3 = jnp.maximum(h3 + b3, 0.0)

        # ---- fused concat + channel_shuffle(groups=2): lane-dense stores ----
        o_ref[:, 0:HW] = x1.astype(o_ref.dtype)
        o_ref[:, HW:2 * HW] = h3.astype(o_ref.dtype)

    return kernel


def _choose_batch_block(N, C, HW, itemsize=4):
    """Pick the per-grid-step batch size.

    Preferences (in order): block fits a conservative VMEM budget (safe under
    v5e's 16 MiB scoped default once double-buffered, and well under v7x's
    64 MiB physical VMEM), all 8 sublanes filled (batch_block*C >= 8 when
    C < 8), >= 2 grid steps so both v7x TensorCores get work, then the
    largest block to amortize the ~0.35us per-grid-step pipeline overhead.
    """
    bytes_per_batch = 4 * C * HW * itemsize      # input rows + output rows
    budget = 2 << 20
    candidates = [b for b in range(1, N + 1)
                  if N % b == 0 and (b == N or (b * C) % 8 == 0)]

    def score(b):
        fits = (b * bytes_per_batch <= budget) and (b * C <= 256)
        return (fits, min(b * C, 8), 1 if (N // b) >= 2 else 0, b)

    return max(candidates, key=score)


def inverted_residual_forward(x_nchw, params, *, batch_block=None):
    """InvertedResidual forward (benchmodel=1, stride=1, inference-mode BN)."""
    N, Cin, H, W = x_nchw.shape
    assert Cin % 2 == 0
    C = Cin // 2
    HW = H * W
    # TODO(synk): pad HW to a multiple of 128 (or pack rows into lanes) for
    # production spatial sizes like 14x14 / 7x7.
    assert HW % 128 == 0, "lane-dense layout requires H*W % 128 == 0"

    B = batch_block if batch_block is not None else _choose_batch_block(N, C, HW)
    assert N % B == 0
    BC, B2C = B * C, B * 2 * C
    steps = N // B

    f32 = jnp.float32
    # ---- fold BatchNorm scales into conv weights (host-side, tiny) ----
    w1f = (params["w1"][0] * params["s1"][0]).astype(f32)      # (C, C) [cout, cin]
    dwf = (params["dw"][0] * params["s2"][0]).astype(f32)      # (C, 9)
    w3f = (params["w3"][0] * params["s3"][0]).astype(f32)      # (C, C)
    b1f = params["b1"][0, :, 0].astype(f32)                    # (C,)
    b3f = (params["b3"][0, :, 0] + w3f @ params["b2"][0, :, 0]).astype(f32)

    # ---- block-diagonal weights: the 1x1 convs (and the x1 row selection)
    #      become single 2-D MXU matmuls over packed (batch*chan, HW) tiles ----
    eye_b = jnp.eye(B, dtype=f32)
    zc = jnp.zeros((C, C), f32)
    w1_bd = jnp.kron(eye_b, jnp.concatenate([zc, w1f], axis=1))            # (BC, B2C)
    sel_bd = jnp.kron(eye_b, jnp.concatenate([jnp.eye(C, dtype=f32), zc], axis=1))
    w3_bd = jnp.kron(eye_b, w3f)                                           # (BC, BC)
    dw_t = jnp.tile(dwf, (B, 1))                                           # (BC, 9)
    b1col = jnp.tile(b1f, B).reshape(BC, 1)
    b3col = jnp.tile(b3f, B).reshape(BC, 1)

    # NCHW -> (N*2C, HW): free reshape, rows fully packed onto sublanes.
    x2d = x_nchw.reshape(N * Cin, HW)

    mm_flops = 2 * HW * (2 * BC * B2C + BC * BC) * steps
    vec_flops = 32 * N * C * HW
    bytes_accessed = 4 * (2 * N * Cin * HW + BC * (2 * B2C + BC + 16))

    out2d = pl.pallas_call(
        _make_kernel(H, W),
        out_shape=jax.ShapeDtypeStruct((N * C, 2 * HW), x_nchw.dtype),
        grid_spec=pltpu.PrefetchScalarGridSpec(
            num_scalar_prefetch=0,
            grid=(steps,),
            in_specs=[
                pl.BlockSpec((B2C, HW), lambda g: (g, 0)),    # activations
                pl.BlockSpec((BC, B2C), lambda g: (0, 0)),    # w1 (block-diag, BN folded)
                pl.BlockSpec((BC, B2C), lambda g: (0, 0)),    # x1 row selection
                pl.BlockSpec((BC, BC), lambda g: (0, 0)),     # w3 (block-diag, BN folded)
                pl.BlockSpec((BC, 9), lambda g: (0, 0)),      # depthwise taps
                pl.BlockSpec((BC, 1), lambda g: (0, 0)),      # b1
                pl.BlockSpec((BC, 1), lambda g: (0, 0)),      # b3 (+ w3 @ b2)
            ],
            out_specs=pl.BlockSpec((BC, 2 * HW), lambda g: (g, 0)),
        ),
        compiler_params=pltpu.CompilerParams(
            dimension_semantics=("parallel",)),
        cost_estimate=pl.CostEstimate(
            flops=int(mm_flops + vec_flops), transcendentals=0,
            bytes_accessed=int(bytes_accessed)),
    )(x2d, w1_bd, sel_bd, w3_bd, dw_t, b1col, b3col)

    # (N*C, 2*HW) -> (N, 2C, H, W): free reshape; channels already shuffled.
    return out2d.reshape(N, Cin, H, W)


def fold_bn(gamma, beta, mean, var, eps=1e-5):
    scale = gamma / jnp.sqrt(var + eps)
    bias = beta - mean * scale
    return scale.reshape(1, -1, 1), bias.reshape(1, -1, 1)


def make_params(key, C):
    ks = jax.random.split(key, 16)
    w1 = jax.random.normal(ks[0], (1, C, C), jnp.float32) * 0.2   # (*, cout, cin)
    dw = jax.random.normal(ks[1], (1, C, 9), jnp.float32) * 0.2   # (*, c, kh*3+kw)
    w3 = jax.random.normal(ks[2], (1, C, C), jnp.float32) * 0.2

    def bn(k1, k2, k3, k4):
        g = jax.random.uniform(k1, (C,), jnp.float32, 0.8, 1.2)
        b = jax.random.normal(k2, (C,), jnp.float32) * 0.1
        m = jax.random.normal(k3, (C,), jnp.float32) * 0.1
        v = jax.random.uniform(k4, (C,), jnp.float32, 0.5, 1.5)
        return fold_bn(g, b, m, v)

    s1, b1 = bn(ks[3], ks[4], ks[5], ks[6])
    s2, b2 = bn(ks[7], ks[8], ks[9], ks[10])
    s3, b3 = bn(ks[11], ks[12], ks[13], ks[14])
    return {"w1": w1, "s1": s1, "b1": b1, "dw": dw, "s2": s2, "b2": b2,
            "w3": w3, "s3": s3, "b3": b3}


def reference_forward(x_nchw, p):
    """Pure-JAX reference (same math, XLA convs) used only for validation."""
    N, Cin, H, W = x_nchw.shape
    C = Cin // 2
    x = jnp.transpose(x_nchw, (0, 2, 3, 1))           # NHWC
    x1, x2 = x[..., :C], x[..., C:]
    w1 = p["w1"][0]
    s1, b1 = p["s1"][0, :, 0], p["b1"][0, :, 0]
    h = jnp.einsum("nhwc,dc->nhwd", x2, w1)
    h = jnp.maximum(h * s1 + b1, 0.0)
    dw = p["dw"][0].reshape(C, 3, 3).transpose(1, 2, 0).reshape(3, 3, 1, C)
    h2 = lax.conv_general_dilated(
        h, dw, window_strides=(1, 1), padding=((1, 1), (1, 1)),
        dimension_numbers=("NHWC", "HWIO", "NHWC"), feature_group_count=C)
    s2, b2 = p["s2"][0, :, 0], p["b2"][0, :, 0]
    h2 = h2 * s2 + b2
    w3 = p["w3"][0]
    s3, b3 = p["s3"][0, :, 0], p["b3"][0, :, 0]
    h3 = jnp.einsum("nhwc,dc->nhwd", h2, w3)
    h3 = jnp.maximum(h3 * s3 + b3, 0.0)
    out = jnp.concatenate([x1, h3], axis=-1)
    out = out.reshape(N, H, W, 2, C)
    out = jnp.transpose(out, (0, 1, 2, 4, 3)).reshape(N, H, W, 2 * C)
    return jnp.transpose(out, (0, 3, 1, 2))


if __name__ == "__main__":
    key = jax.random.PRNGKey(0)
    k_x, k_p = jax.random.split(key)

    # InvertedResidual(inp=8, oup=8, stride=1, benchmodel=1) -> oup_inc = 4
    N, Cin, H, W = 2, 8, 16, 16
    x = jax.random.normal(k_x, (N, Cin, H, W), jnp.float32)
    params = make_params(k_p, Cin // 2)

    out = jax.block_until_ready(inverted_residual_forward(x, params))

    ref = jax.block_until_ready(reference_forward(x, params))
    np.testing.assert_allclose(np.asarray(out), np.asarray(ref),
                               atol=1e-4, rtol=1e-4)
    assert out.shape == (N, Cin, H, W)
    print("KERNEL_OK")
</pallas_src>

<mosaic_0001>
module attributes {stable_mosaic.version = 11 : i64} {
  func.func @kernel(%arg0: i32, %arg1: memref<16x256xf32, #tpu.memory_space<vmem>>, %arg2: memref<8x16xf32, #tpu.memory_space<vmem>>, %arg3: memref<8x16xf32, #tpu.memory_space<vmem>>, %arg4: memref<8x8xf32, #tpu.memory_space<vmem>>, %arg5: memref<8x9xf32, #tpu.memory_space<vmem>>, %arg6: memref<8x1xf32, #tpu.memory_space<vmem>>, %arg7: memref<8x1xf32, #tpu.memory_space<vmem>>, %arg8: memref<8x512xf32, #tpu.memory_space<vmem>>) attributes {dimension_semantics = [#tpu.dimension_semantics<parallel>], iteration_bounds = array<i64: 1>, scalar_prefetch = 0 : i64, scratch_operands = 0 : i64, tpu.core_type = #tpu.core_type<tc>, window_params = [{transform_indices = @transform_0, window_bounds = array<i64: 16, 256>}, {pipeline_mode = #tpu.pipeline_mode<synchronous>, transform_indices = @transform_1, window_bounds = array<i64: 8, 16>}, {pipeline_mode = #tpu.pipeline_mode<synchronous>, transform_indices = @transform_2, window_bounds = array<i64: 8, 16>}, {pipeline_mode = #tpu.pipeline_mode<synchronous>, transform_indices = @transform_3, window_bounds = array<i64: 8, 8>}, {pipeline_mode = #tpu.pipeline_mode<synchronous>, transform_indices = @transform_4, window_bounds = array<i64: 8, 9>}, {pipeline_mode = #tpu.pipeline_mode<synchronous>, transform_indices = @transform_5, window_bounds = array<i64: 8, 1>}, {pipeline_mode = #tpu.pipeline_mode<synchronous>, transform_indices = @transform_6, window_bounds = array<i64: 8, 1>}, {transform_indices = @transform_7, window_bounds = array<i64: 8, 512>}]} {
    %c0 = arith.constant 0 : index
    %c0_0 = arith.constant 0 : index
    %0 = vector.load %arg1[%c0, %c0_0] : memref<16x256xf32, #tpu.memory_space<vmem>>, vector<16x256xf32>
    %c0_1 = arith.constant 0 : index
    %c0_2 = arith.constant 0 : index
    %1 = vector.load %arg2[%c0_1, %c0_2] : memref<8x16xf32, #tpu.memory_space<vmem>>, vector<8x16xf32>
    %c0_3 = arith.constant 0 : index
    %c0_4 = arith.constant 0 : index
    %2 = vector.load %arg3[%c0_3, %c0_4] : memref<8x16xf32, #tpu.memory_space<vmem>>, vector<8x16xf32>
    %c0_5 = arith.constant 0 : index
    %c0_6 = arith.constant 0 : index
    %3 = vector.load %arg4[%c0_5, %c0_6] : memref<8x8xf32, #tpu.memory_space<vmem>>, vector<8x8xf32>
    %c0_7 = arith.constant 0 : index
    %c0_8 = arith.constant 0 : index
    %4 = vector.load %arg5[%c0_7, %c0_8] : memref<8x9xf32, #tpu.memory_space<vmem>>, vector<8x9xf32>
    %c0_9 = arith.constant 0 : index
    %c0_10 = arith.constant 0 : index
    %5 = vector.load %arg6[%c0_9, %c0_10] : memref<8x1xf32, #tpu.memory_space<vmem>>, vector<8x1xf32>
    %c0_11 = arith.constant 0 : index
    %c0_12 = arith.constant 0 : index
    %6 = vector.load %arg7[%c0_11, %c0_12] : memref<8x1xf32, #tpu.memory_space<vmem>>, vector<8x1xf32>
    %cst = arith.constant dense<0.000000e+00> : vector<8x256xf32>
    %7 = tpu.matmul %2, %0, %cst {dimension_numbers = #tpu.dot_dimension_numbers<[1], [0], [0], [1], [0, 0, 1, 1], [], []>, precision = #tpu.contract_precision<fp32>} : vector<8x16xf32>, vector<16x256xf32>, vector<8x256xf32> -> vector<8x256xf32>
    %cst_13 = arith.constant dense<0.000000e+00> : vector<8x256xf32>
    %8 = tpu.matmul %1, %0, %cst_13 {dimension_numbers = #tpu.dot_dimension_numbers<[1], [0], [0], [1], [0, 0, 1, 1], [], []>, precision = #tpu.contract_precision<fp32>} : vector<8x16xf32>, vector<16x256xf32>, vector<8x256xf32> -> vector<8x256xf32>
    %9 = vector.broadcast %5 : vector<8x1xf32> to vector<8x256xf32>
    %10 = arith.addf %8, %9 : vector<8x256xf32>
    %cst_14 = arith.constant 0.000000e+00 : f32
    %11 = vector.broadcast %cst_14 : f32 to vector<8x256xf32>
    %12 = arith.maximumf %10, %11 : vector<8x256xf32>
    %13 = tpu.iota {dimensions = array<i32: 1>} : vector<1x256xi32>
    %c16_i32 = arith.constant 16 : i32
    %c0_i32 = arith.constant 0 : i32
    %14 = arith.cmpi eq, %c16_i32, %c0_i32 : i32
    %c1_i32 = arith.constant 1 : i32
    %15 = arith.select %14, %c1_i32, %c16_i32 : i32
    %16 = vector.broadcast %15 : i32 to vector<1x256xi32>
    %17 = arith.remsi %13, %16 : vector<1x256xi32>
    %c0_i32_15 = arith.constant 0 : i32
    %18 = vector.broadcast %c0_i32_15 : i32 to vector<1x256xi32>
    %19 = arith.cmpi ne, %17, %18 : vector<1x256xi32>
    %c0_i32_16 = arith.constant 0 : i32
    %20 = vector.broadcast %c0_i32_16 : i32 to vector<1x256xi32>
    %21 = arith.cmpi slt, %17, %20 : vector<1x256xi32>
    %c0_i32_17 = arith.constant 0 : i32
    %22 = arith.cmpi slt, %15, %c0_i32_17 : i32
    %23 = vector.broadcast %22 : i1 to vector<1x256xi1>
    %24 = vector.broadcast %23 : vector<1x256xi1> to vector<1x256xi1>
    %25 = arith.xori %21, %24 : vector<1x256xi1>
    %26 = arith.andi %25, %19 : vector<1x256xi1>
    %27 = vector.broadcast %15 : i32 to vector<1x256xi32>
    %28 = arith.addi %17, %27 : vector<1x256xi32>
    %29 = arith.select %26, %28, %17 : vector<1x256xi1>, vector<1x256xi32>
    %c15_i32 = arith.constant 15 : i32
    %30 = vector.broadcast %c15_i32 : i32 to vector<1x256xi32>
    %31 = arith.cmpi slt, %29, %30 : vector<1x256xi32>
    %cst_18 = arith.constant 0.000000e+00 : f32
    %32 = vector.shape_cast %31 : vector<1x256xi1> to vector<1x256xi1>
    %33 = vector.broadcast %32 : vector<1x256xi1> to vector<8x256xi1>
    %34 = vector.broadcast %cst_18 : f32 to vector<8x256xf32>
    %35 = arith.select %33, %12, %34 : vector<8x256xi1>, vector<8x256xf32>
    %c0_i32_19 = arith.constant 0 : i32
    %36 = vector.broadcast %c0_i32_19 : i32 to vector<1x256xi32>
    %37 = arith.cmpi sgt, %29, %36 : vector<1x256xi32>
    %cst_20 = arith.constant 0.000000e+00 : f32
    %38 = vector.shape_cast %37 : vector<1x256xi1> to vector<1x256xi1>
    %39 = vector.broadcast %38 : vector<1x256xi1> to vector<8x256xi1>
    %40 = vector.broadcast %cst_20 : f32 to vector<8x256xf32>
    %41 = arith.select %39, %12, %40 : vector<8x256xi1>, vector<8x256xf32>
    %c240_i32 = arith.constant 240 : i32
    %42 = vector.broadcast %c240_i32 : i32 to vector<1x256xi32>
    %43 = arith.cmpi slt, %13, %42 : vector<1x256xi32>
    %c16_i32_21 = arith.constant 16 : i32
    %44 = vector.broadcast %c16_i32_21 : i32 to vector<1x256xi32>
    %45 = arith.cmpi sge, %13, %44 : vector<1x256xi32>
    %c1_i32_22 = arith.constant 1 : i32
    %46 = tpu.dynamic_rotate %35 by %c1_i32_22 dim 1 : vector<8x256xf32>, i32 -> vector<8x256xf32>
    %47 = vector.extract_strided_slice %4 {offsets = [0, 3], sizes = [8, 1], strides = [1, 1]} : vector<8x9xf32> to vector<8x1xf32>
    %48 = vector.broadcast %47 : vector<8x1xf32> to vector<8x256xf32>
    %49 = arith.mulf %46, %48 : vector<8x256xf32>
    %50 = vector.extract_strided_slice %4 {offsets = [0, 4], sizes = [8, 1], strides = [1, 1]} : vector<8x9xf32> to vector<8x1xf32>
    %51 = vector.broadcast %50 : vector<8x1xf32> to vector<8x256xf32>
    %52 = arith.mulf %12, %51 : vector<8x256xf32>
    %53 = arith.addf %49, %52 : vector<8x256xf32>
    %c255_i32 = arith.constant 255 : i32
    %54 = tpu.dynamic_rotate %41 by %c255_i32 dim 1 : vector<8x256xf32>, i32 -> vector<8x256xf32>
    %55 = vector.extract_strided_slice %4 {offsets = [0, 5], sizes = [8, 1], strides = [1, 1]} : vector<8x9xf32> to vector<8x1xf32>
    %56 = vector.broadcast %55 : vector<8x1xf32> to vector<8x256xf32>
    %57 = arith.mulf %54, %56 : vector<8x256xf32>
    %58 = arith.addf %53, %57 : vector<8x256xf32>
    %c241_i32 = arith.constant 241 : i32
    %59 = tpu.dynamic_rotate %35 by %c241_i32 dim 1 : vector<8x256xf32>, i32 -> vector<8x256xf32>
    %60 = vector.extract_strided_slice %4 {offsets = [0, 6], sizes = [8, 1], strides = [1, 1]} : vector<8x9xf32> to vector<8x1xf32>
    %61 = vector.broadcast %60 : vector<8x1xf32> to vector<8x256xf32>
    %62 = arith.mulf %59, %61 : vector<8x256xf32>
    %c240_i32_23 = arith.constant 240 : i32
    %63 = tpu.dynamic_rotate %12 by %c240_i32_23 dim 1 : vector<8x256xf32>, i32 -> vector<8x256xf32>
    %64 = vector.extract_strided_slice %4 {offsets = [0, 7], sizes = [8, 1], strides = [1, 1]} : vector<8x9xf32> to vector<8x1xf32>
    %65 = vector.broadcast %64 : vector<8x1xf32> to vector<8x256xf32>
    %66 = arith.mulf %63, %65 : vector<8x256xf32>
    %67 = arith.addf %62, %66 : vector<8x256xf32>
    %c239_i32 = arith.constant 239 : i32
    %68 = tpu.dynamic_rotate %41 by %c239_i32 dim 1 : vector<8x256xf32>, i32 -> vector<8x256xf32>
    %69 = vector.extract_strided_slice %4 {offsets = [0, 8], sizes = [8, 1], strides = [1, 1]} : vector<8x9xf32> to vector<8x1xf32>
    %70 = vector.broadcast %69 : vector<8x1xf32> to vector<8x256xf32>
    %71 = arith.mulf %68, %70 : vector<8x256xf32>
    %72 = arith.addf %67, %71 : vector<8x256xf32>
    %cst_24 = arith.constant 0.000000e+00 : f32
    %73 = vector.shape_cast %43 : vector<1x256xi1> to vector<1x256xi1>
    %74 = vector.broadcast %73 : vector<1x256xi1> to vector<8x256xi1>
    %75 = vector.broadcast %cst_24 : f32 to vector<8x256xf32>
    %76 = arith.select %74, %72, %75 : vector<8x256xi1>, vector<8x256xf32>
    %77 = arith.addf %58, %76 : vector<8x256xf32>
    %c17_i32 = arith.constant 17 : i32
    %78 = tpu.dynamic_rotate %35 by %c17_i32 dim 1 : vector<8x256xf32>, i32 -> vector<8x256xf32>
    %79 = vector.extract_strided_slice %4 {offsets = [0, 0], sizes = [8, 1], strides = [1, 1]} : vector<8x9xf32> to vector<8x1xf32>
    %80 = vector.broadcast %79 : vector<8x1xf32> to vector<8x256xf32>
    %81 = arith.mulf %78, %80 : vector<8x256xf32>
    %c16_i32_25 = arith.constant 16 : i32
    %82 = tpu.dynamic_rotate %12 by %c16_i32_25 dim 1 : vector<8x256xf32>, i32 -> vector<8x256xf32>
    %83 = vector.extract_strided_slice %4 {offsets = [0, 1], sizes = [8, 1], strides = [1, 1]} : vector<8x9xf32> to vector<8x1xf32>
    %84 = vector.broadcast %83 : vector<8x1xf32> to vector<8x256xf32>
    %85 = arith.mulf %82, %84 : vector<8x256xf32>
    %86 = arith.addf %81, %85 : vector<8x256xf32>
    %c15_i32_26 = arith.constant 15 : i32
    %87 = tpu.dynamic_rotate %41 by %c15_i32_26 dim 1 : vector<8x256xf32>, i32 -> vector<8x256xf32>
    %88 = vector.extract_strided_slice %4 {offsets = [0, 2], sizes = [8, 1], strides = [1, 1]} : vector<8x9xf32> to vector<8x1xf32>
    %89 = vector.broadcast %88 : vector<8x1xf32> to vector<8x256xf32>
    %90 = arith.mulf %87, %89 : vector<8x256xf32>
    %91 = arith.addf %86, %90 : vector<8x256xf32>
    %cst_27 = arith.constant 0.000000e+00 : f32
    %92 = vector.shape_cast %45 : vector<1x256xi1> to vector<1x256xi1>
    %93 = vector.broadcast %92 : vector<1x256xi1> to vector<8x256xi1>
    %94 = vector.broadcast %cst_27 : f32 to vector<8x256xf32>
    %95 = arith.select %93, %91, %94 : vector<8x256xi1>, vector<8x256xf32>
    %96 = arith.addf %77, %95 : vector<8x256xf32>
    %cst_28 = arith.constant dense<0.000000e+00> : vector<8x256xf32>
    %97 = tpu.matmul %3, %96, %cst_28 {dimension_numbers = #tpu.dot_dimension_numbers<[1], [0], [0], [1], [0, 0, 1, 1], [], []>, precision = #tpu.contract_precision<fp32>} : vector<8x8xf32>, vector<8x256xf32>, vector<8x256xf32> -> vector<8x256xf32>
    %98 = vector.broadcast %6 : vector<8x1xf32> to vector<8x256xf32>
    %99 = arith.addf %97, %98 : vector<8x256xf32>
    %cst_29 = arith.constant 0.000000e+00 : f32
    %100 = vector.broadcast %cst_29 : f32 to vector<8x256xf32>
    %101 = arith.maximumf %99, %100 : vector<8x256xf32>
    %c0_30 = arith.constant 0 : index
    %c0_31 = arith.constant 0 : index
    %102 = vector.load %arg8[%c0_30, %c0_31] : memref<8x512xf32, #tpu.memory_space<vmem>>, vector<8x256xf32>
    tpu.vector_store %arg8[%c0_30, %c0_31], %7 {strides = array<i32>} : memref<8x512xf32, #tpu.memory_space<vmem>>, vector<8x256xf32>,
    %c0_32 = arith.constant 0 : index
    %c256 = arith.constant 256 : index
    %103 = vector.load %arg8[%c0_32, %c256] : memref<8x512xf32, #tpu.memory_space<vmem>>, vector<8x256xf32>
    tpu.vector_store %arg8[%c0_32, %c256], %101 {strides = array<i32>} : memref<8x512xf32, #tpu.memory_space<vmem>>, vector<8x256xf32>,
    return
  }
  func.func @transform_0(%arg0: i32) -> (i32, i32) {
    %c0_i32 = arith.constant 0 : i32
    %c0_i32_0 = arith.constant 0 : i32
    return %arg0, %c0_i32 : i32, i32
  }
  func.func @transform_1(%arg0: i32) -> (i32, i32) {
    %c0_i32 = arith.constant 0 : i32
    %c0_i32_0 = arith.constant 0 : i32
    %c0_i32_1 = arith.constant 0 : i32
    return %c0_i32, %c0_i32_0 : i32, i32
  }
  func.func @transform_2(%arg0: i32) -> (i32, i32) {
    %c0_i32 = arith.constant 0 : i32
    %c0_i32_0 = arith.constant 0 : i32
    %c0_i32_1 = arith.constant 0 : i32
    return %c0_i32, %c0_i32_0 : i32, i32
  }
  func.func @transform_3(%arg0: i32) -> (i32, i32) {
    %c0_i32 = arith.constant 0 : i32
    %c0_i32_0 = arith.constant 0 : i32
    %c0_i32_1 = arith.constant 0 : i32
    return %c0_i32, %c0_i32_0 : i32, i32
  }
  func.func @transform_4(%arg0: i32) -> (i32, i32) {
    %c0_i32 = arith.constant 0 : i32
    %c0_i32_0 = arith.constant 0 : i32
    %c0_i32_1 = arith.constant 0 : i32
    return %c0_i32, %c0_i32_0 : i32, i32
  }
  func.func @transform_5(%arg0: i32) -> (i32, i32) {
    %c0_i32 = arith.constant 0 : i32
    %c0_i32_0 = arith.constant 0 : i32
    %c0_i32_1 = arith.constant 0 : i32
    return %c0_i32, %c0_i32_0 : i32, i32
  }
  func.func @transform_6(%arg0: i32) -> (i32, i32) {
    %c0_i32 = arith.constant 0 : i32
    %c0_i32_0 = arith.constant 0 : i32
    %c0_i32_1 = arith.constant 0 : i32
    return %c0_i32, %c0_i32_0 : i32, i32
  }
  func.func @transform_7(%arg0: i32) -> (i32, i32) {
    %c0_i32 = arith.constant 0 : i32
    %c0_i32_0 = arith.constant 0 : i32
    return %arg0, %c0_i32 : i32, i32
  }
}

</mosaic_0001>

<llo_original>
// kernel: tpu_custom_call.1
$region0: #{tpu_custom_call.1}
  #allocation0 [shape = 'u32[]', space=smem, size = 0x4, offset = 0x4, fixed_abs, tag = 'smem constant byte address 0x4 - core index']
  #allocation1 [shape = 'u32[144,128]{1,0:T(1,128)}', space=vmem, size = 0x12000, scoped, tag = 'internal scratch']
  %s0 = inlined_call_operand.hbm [shape: f32[16,256], index: 0, kind: input, shape index: {}]
  %s1 = inlined_call_operand.vmem [shape: f32[8,16], index: 1, kind: input, shape index: {}]
  %s2 = inlined_call_operand.vmem [shape: f32[8,16], index: 2, kind: input, shape index: {}]
  %s3 = inlined_call_operand.vmem [shape: f32[8,8], index: 3, kind: input, shape index: {}]
  %s4 = inlined_call_operand.vmem [shape: f32[8,9], index: 4, kind: input, shape index: {}]
  %s5 = inlined_call_operand.vmem [shape: f32[8,1], index: 5, kind: input, shape index: {}]
  %s6 = inlined_call_operand.vmem [shape: f32[8,1], index: 6, kind: input, shape index: {}]
  %s7 = inlined_call_operand.hbm [shape: f32[8,512], index: 7, kind: output, shape index: {}]
  %s8 = sld [smem:[#allocation0]]
  $region42: #{tpu_custom_call.1} parent=0
    _
  %s10 = ssub.s32 1, %s8
  %s11 = scalar_select 0, %s10, %s8
  $region1: #{tpu_custom_call.1} parent=0
    #allocation2 [shape = 'u8[16384]{0}', space=vmem, size = 0x4000, scoped, tag = 'input window, operand 0, single buffered']
    #allocation3 [shape = 's32[1]{0}', space=sflag, size = 0x4, scoped, tag = 'scoped memory for tpu_custom_call.1']
    #allocation4 [shape = 's32[1]{0}', space=sflag, size = 0x4, scoped, tag = 'scoped memory for tpu_custom_call.1']
    #allocation5 [shape = 'u8[16384]{0}', space=vmem, size = 0x4000, scoped, tag = 'output window, operand 0, single buffered']
    %12 = vsyncpa [#allocation3], 0
    %13 = vsyncpa [#allocation4], 0
    // Predicated region
    $region2: #{tpu_custom_call.1} parent=1 // pred_check
      _
    $region3: #{tpu_custom_call.1} parent=1 // pred_check_branch
      %15 = sbr.rel (0) target = $region5
    $region4: #{tpu_custom_call.1} parent=1 // pred_region
      %s17 = ssub.s32 512, 512
      %18 = vsyncadd [#allocation3], %s17
      %s19 = sshll.u32 [#allocation2], 4
      %s20 = int_to_ptr.vmem [resolvable:$true] %s19
      %25 = dma.hbm_to_vmem [thread:$0]  %s0, 512, %s20, [#allocation3], 256, 256, 16
    $region5: #{tpu_custom_call.1} parent=1 // pred_fallthru
      _
    // Predicated region
    $region6: #{tpu_custom_call.1} parent=1 // pred_check
      _
    $region7: #{tpu_custom_call.1} parent=1 // pred_check_branch
      %27 = sbr.rel (0) target = $region9
    $region8: #{tpu_custom_call.1} parent=1 // pred_region
      _
    $region9: #{tpu_custom_call.1} parent=1 // pred_fallthru
      _
    // Predicated region
    $region10: #{tpu_custom_call.1} parent=1 // pred_check
      _
    $region11: #{tpu_custom_call.1} parent=1 // pred_check_branch
      %29 = sbr.rel (0) target = $region13
    $region12: #{tpu_custom_call.1} parent=1 // pred_region
      _
    $region13: #{tpu_custom_call.1} parent=1 // pred_fallthru
      _
    // Predicated region
    $region14: #{tpu_custom_call.1} parent=1 // pred_check
      _
    $region15: #{tpu_custom_call.1} parent=1 // pred_check_branch
      %31 = sbr.rel (0) target = $region17
    $region16: #{tpu_custom_call.1} parent=1 // pred_region
      _
    $region17: #{tpu_custom_call.1} parent=1 // pred_fallthru
      _
    // Predicated region
    $region18: #{tpu_custom_call.1} parent=1 // pred_check
      _
    $region19: #{tpu_custom_call.1} parent=1 // pred_check_branch
      %33 = sbr.rel (0) target = $region21
    $region20: #{tpu_custom_call.1} parent=1 // pred_region
      _
    $region21: #{tpu_custom_call.1} parent=1 // pred_fallthru
      _
    // Predicated region
    $region22: #{tpu_custom_call.1} parent=1 // pred_check
      _
    $region23: #{tpu_custom_call.1} parent=1 // pred_check_branch
      %35 = sbr.rel (0) target = $region25
    $region24: #{tpu_custom_call.1} parent=1 // pred_region
      _
    $region25: #{tpu_custom_call.1} parent=1 // pred_fallthru
      _
    // Predicated region
    $region26: #{tpu_custom_call.1} parent=1 // pred_check
      _
    $region27: #{tpu_custom_call.1} parent=1 // pred_check_branch
      %37 = sbr.rel (0) target = $region29
    $region28: #{tpu_custom_call.1} parent=1 // pred_region
      _
    $region29: #{tpu_custom_call.1} parent=1 // pred_fallthru
      _
    // Predicated region
    $region30: #{tpu_custom_call.1} parent=1 // pred_check
      _
    $region31: #{tpu_custom_call.1} parent=1 // pred_check_branch
      %39 = sbr.rel (0) target = $region33
    $region32: #{tpu_custom_call.1} parent=1 // pred_region
      %40 = dma.done [#allocation3], 512
    $region33: #{tpu_custom_call.1} parent=1 // pred_fallthru
      _
    %v41 = vld [vmem:[#allocation2] sm:$0xff]
    %v42 = vld [vmem:[#allocation2 + $0x8] sm:$0xff]
    %v43 = vld [vmem:[#allocation2 + $0x10] sm:$0xff]
    %v44 = vld [vmem:[#allocation2 + $0x18] sm:$0xff]
    %v45 = vld [vmem:[%s1] sm:$0xff]
    %v46 = vld [vmem:[%s2] sm:$0xff]
    %v47 = vld [vmem:[%s3] sm:$0xff]
    %v48 = vld [vmem:[%s4] sm:$0xff]
    %v49 = vld [vmem:[%s5] sm:$0xff]
    %v50 = vld [vmem:[%s6] sm:$0xff]
    %vm51 = vcmask 130048
    %v53 = vsel %vm51, %v46, 0
    %v55 = vand.u32 %v42, 4294901760
    %56 = vmatprep.subr.mxu0 %v55
    %v57 = vand.u32 %v41, 4294901760
    %58 = vmatpush1.msra.mxu0 %v57
    %v59 = vand.u32 %v44, 4294901760
    %60 = vmatprep.subr.mxu0 %v59
    %v61 = vand.u32 %v43, 4294901760
    %62 = vmatpush1.msra.mxu0 %v61
    %63 = vmatprep.subr.mxu0 0.0
    %64 = vmatpush1.msra.mxu0 0.0
    %65 = vmatprep.subr.mxu0 0.0
    %66 = vmatpush1.msra.mxu0 0.0
    %67 = vmatprep.subr.mxu0 0.0
    %68 = vmatpush1.msra.mxu0 0.0
    %69 = vmatprep.subr.mxu0 0.0
    %70 = vmatpush1.msra.mxu0 0.0
    %71 = vmatprep.subr.mxu0 0.0
    %72 = vmatpush1.msra.mxu0 0.0
    %73 = vmatprep.subr.mxu0 0.0
    %74 = vmatpush1.msra.mxu0 0.0
    %75 = vmatprep.subr.mxu0 0.0
    %76 = vmatpush1.msra.mxu0 0.0
    %77 = vmatprep.subr.mxu0 0.0
    %78 = vmatpush1.msra.mxu0 0.0
    %79 = vmatprep.subr.mxu0 0.0
    %80 = vmatpush1.msra.mxu0 0.0
    %81 = vmatprep.subr.mxu0 0.0
    %82 = vmatpush1.msra.mxu0 0.0
    %83 = vmatprep.subr.mxu0 0.0
    %84 = vmatpush1.msra.mxu0 0.0
    %85 = vmatprep.subr.mxu0 0.0
    %86 = vmatpush1.msra.mxu0 0.0
    %87 = vmatprep.subr.mxu0 0.0
    %88 = vmatpush1.msra.mxu0 0.0
    %89 = vmatprep.subr.mxu0 0.0
    %90 = vmatpush1.msra.mxu0 0.0
    %91 = vmatprep.subr.mxu0 0.0
    %92 = vmatpush1.msra.mxu0 0.0
    %93 = vmatprep.subr.mxu0 0.0
    %94 = vmatpush1.msra.mxu0 0.0
    %95 = vmatprep.subr.mxu0 0.0
    %96 = vmatpush1.msra.mxu0 0.0
    %97 = vmatprep.subr.mxu0 0.0
    %98 = vmatpush1.msra.mxu0 0.0
    %99 = vmatprep.subr.mxu0 0.0
    %100 = vmatpush1.msra.mxu0 0.0
    %101 = vmatprep.subr.mxu0 0.0
    %102 = vmatpush1.msra.mxu0 0.0
    %103 = vmatprep.subr.mxu0 0.0
    %104 = vmatpush1.msra.mxu0 0.0
    %105 = vmatprep.subr.mxu0 0.0
    %106 = vmatpush1.msra.mxu0 0.0
    %107 = vmatprep.subr.mxu0 0.0
    %108 = vmatpush1.msra.mxu0 0.0
    %109 = vmatprep.subr.mxu0 0.0
    %110 = vmatpush1.msra.mxu0 0.0
    %111 = vmatprep.subr.mxu0 0.0
    %112 = vmatpush1.msra.mxu0 0.0
    %113 = vmatprep.subr.mxu0 0.0
    %114 = vmatpush1.msra.mxu0 0.0
    %115 = vmatprep.subr.mxu0 0.0
    %116 = vmatpush1.msra.mxu0 0.0
    %117 = vmatprep.subr.mxu0 0.0
    %118 = vmatpush1.msra.mxu0 0.0
    %119 = vmatprep.subr.mxu0 0.0
    %120 = vmatpush1.msra.mxu0 0.0
    %121 = vmatprep.subr.mxu0 0.0
    %122 = vmatpush1.msra.mxu0 0.0
    %123 = vmatprep.mubr.f32.mxu0 0.0
    %v124 = vand.u32 %v53, 4294901760
    %v125 = vsub.f32 %v53, %v124
    %v126 = vand.u32 %v125, 4294901760
    %v127 = vsub.f32 %v125, %v126
    %v128 = vand.u32 %v127, 4294901760
    %129 = vmatmul.mubr.f32.gmra.mrb[0].mxu0 %v128
    %v130 = vpop.f32.mrb[0].mxu0
    %v131 = vadd.f32 0.0, %v130
    %v132 = vpop.f32.mrb[0].mxu0
    %v133 = vadd.f32 0.0, %v132
    %134 = vdwg.mxu0
    %v135 = vand.u32 %v42, 4294901760
    %v136 = vsub.f32 %v42, %v135
    %v137 = vand.u32 %v136, 4294901760
    %v138 = vsub.f32 %v136, %v137
    %v139 = vand.u32 %v138, 4294901760
    %140 = vmatprep.subr.mxu0 %v139
    %v141 = vand.u32 %v41, 4294901760
    %v142 = vsub.f32 %v41, %v141
    %v143 = vand.u32 %v142, 4294901760
    %v144 = vsub.f32 %v142, %v143
    %v145 = vand.u32 %v144, 4294901760
    %146 = vmatpush1.msra.mxu0 %v145
    %v147 = vand.u32 %v44, 4294901760
    %v148 = vsub.f32 %v44, %v147
    %v149 = vand.u32 %v148, 4294901760
    %v150 = vsub.f32 %v148, %v149
    %v151 = vand.u32 %v150, 4294901760
    %152 = vmatprep.subr.mxu0 %v151
    %v153 = vand.u32 %v43, 4294901760
    %v154 = vsub.f32 %v43, %v153
    %v155 = vand.u32 %v154, 4294901760
    %v156 = vsub.f32 %v154, %v155
    %v157 = vand.u32 %v156, 4294901760
    %158 = vmatpush1.msra.mxu0 %v157
    %159 = vmatprep.subr.mxu0 0.0
    %160 = vmatpush1.msra.mxu0 0.0
    %161 = vmatprep.subr.mxu0 0.0
    %162 = vmatpush1.msra.mxu0 0.0
    %163 = vmatprep.subr.mxu0 0.0
    %164 = vmatpush1.msra.mxu0 0.0
    %165 = vmatprep.subr.mxu0 0.0
    %166 = vmatpush1.msra.mxu0 0.0
    %167 = vmatprep.subr.mxu0 0.0
    %168 = vmatpush1.msra.mxu0 0.0
    %169 = vmatprep.subr.mxu0 0.0
    %170 = vmatpush1.msra.mxu0 0.0
    %171 = vmatprep.subr.mxu0 0.0
    %172 = vmatpush1.msra.mxu0 0.0
    %173 = vmatprep.subr.mxu0 0.0
    %174 = vmatpush1.msra.mxu0 0.0
    %175 = vmatprep.subr.mxu0 0.0
    %176 = vmatpush1.msra.mxu0 0.0
    %177 = vmatprep.subr.mxu0 0.0
    %178 = vmatpush1.msra.mxu0 0.0
    %179 = vmatprep.subr.mxu0 0.0
    %180 = vmatpush1.msra.mxu0 0.0
    %181 = vmatprep.subr.mxu0 0.0
    %182 = vmatpush1.msra.mxu0 0.0
    %183 = vmatprep.subr.mxu0 0.0
    %184 = vmatpush1.msra.mxu0 0.0
    %185 = vmatprep.subr.mxu0 0.0
    %186 = vmatpush1.msra.mxu0 0.0
    %187 = vmatprep.subr.mxu0 0.0
    %188 = vmatpush1.msra.mxu0 0.0
    %189 = vmatprep.subr.mxu0 0.0
    %190 = vmatpush1.msra.mxu0 0.0
    %191 = vmatprep.subr.mxu0 0.0
    %192 = vmatpush1.msra.mxu0 0.0
    %193 = vmatprep.subr.mxu0 0.0
    %194 = vmatpush1.msra.mxu0 0.0
    %195 = vmatprep.subr.mxu0 0.0
    %196 = vmatpush1.msra.mxu0 0.0
    %197 = vmatprep.subr.mxu0 0.0
    %198 = vmatpush1.msra.mxu0 0.0
    %199 = vmatprep.subr.mxu0 0.0
    %200 = vmatpush1.msra.mxu0 0.0
    %201 = vmatprep.subr.mxu0 0.0
    %202 = vmatpush1.msra.mxu0 0.0
    %203 = vmatprep.subr.mxu0 0.0
    %204 = vmatpush1.msra.mxu0 0.0
    %205 = vmatprep.subr.mxu0 0.0
    %206 = vmatpush1.msra.mxu0 0.0
    %207 = vmatprep.subr.mxu0 0.0
    %208 = vmatpush1.msra.mxu0 0.0
    %209 = vmatprep.subr.mxu0 0.0
    %210 = vmatpush1.msra.mxu0 0.0
    %211 = vmatprep.subr.mxu0 0.0
    %212 = vmatpush1.msra.mxu0 0.0
    %213 = vmatprep.subr.mxu0 0.0
    %214 = vmatpush1.msra.mxu0 0.0
    %215 = vmatprep.subr.mxu0 0.0
    %216 = vmatpush1.msra.mxu0 0.0
    %217 = vmatprep.subr.mxu0 0.0
    %218 = vmatpush1.msra.mxu0 0.0
    %219 = vmatprep.mubr.f32.mxu0 0.0
    %v220 = vand.u32 %v53, 4294901760
    %221 = vmatmul.mubr.f32.gmra.mrb[0].mxu0 %v220
    %v222 = vpop.f32.mrb[0].mxu0
    %v223 = vadd.f32 %v131, %v222
    %v224 = vpop.f32.mrb[0].mxu0
    %v225 = vadd.f32 %v133, %v224
    %226 = vdwg.mxu0
    %v227 = vand.u32 %v42, 4294901760
    %v228 = vsub.f32 %v42, %v227
    %229 = vmatprep.subr.mxu0 %v228
    %v230 = vand.u32 %v41, 4294901760
    %v231 = vsub.f32 %v41, %v230
    %232 = vmatpush1.msra.mxu0 %v231
    %v233 = vand.u32 %v44, 4294901760
    %v234 = vsub.f32 %v44, %v233
    %235 = vmatprep.subr.mxu0 %v234
    %v236 = vand.u32 %v43, 4294901760
    %v237 = vsub.f32 %v43, %v236
    %238 = vmatpush1.msra.mxu0 %v237
    %239 = vmatprep.subr.mxu0 0.0
    %240 = vmatpush1.msra.mxu0 0.0
    %241 = vmatprep.subr.mxu0 0.0
    %242 = vmatpush1.msra.mxu0 0.0
    %243 = vmatprep.subr.mxu0 0.0
    %244 = vmatpush1.msra.mxu0 0.0
    %245 = vmatprep.subr.mxu0 0.0
    %246 = vmatpush1.msra.mxu0 0.0
    %247 = vmatprep.subr.mxu0 0.0
    %248 = vmatpush1.msra.mxu0 0.0
    %249 = vmatprep.subr.mxu0 0.0
    %250 = vmatpush1.msra.mxu0 0.0
    %251 = vmatprep.subr.mxu0 0.0
    %252 = vmatpush1.msra.mxu0 0.0
    %253 = vmatprep.subr.mxu0 0.0
    %254 = vmatpush1.msra.mxu0 0.0
    %255 = vmatprep.subr.mxu0 0.0
    %256 = vmatpush1.msra.mxu0 0.0
    %257 = vmatprep.subr.mxu0 0.0
    %258 = vmatpush1.msra.mxu0 0.0
    %259 = vmatprep.subr.mxu0 0.0
    %260 = vmatpush1.msra.mxu0 0.0
    %261 = vmatprep.subr.mxu0 0.0
    %262 = vmatpush1.msra.mxu0 0.0
    %263 = vmatprep.subr.mxu0 0.0
    %264 = vmatpush1.msra.mxu0 0.0
    %265 = vmatprep.subr.mxu0 0.0
    %266 = vmatpush1.msra.mxu0 0.0
    %267 = vmatprep.subr.mxu0 0.0
    %268 = vmatpush1.msra.mxu0 0.0
    %269 = vmatprep.subr.mxu0 0.0
    %270 = vmatpush1.msra.mxu0 0.0
    %271 = vmatprep.subr.mxu0 0.0
    %272 = vmatpush1.msra.mxu0 0.0
    %273 = vmatprep.subr.mxu0 0.0
    %274 = vmatpush1.msra.mxu0 0.0
    %275 = vmatprep.subr.mxu0 0.0
    %276 = vmatpush1.msra.mxu0 0.0
    %277 = vmatprep.subr.mxu0 0.0
    %278 = vmatpush1.msra.mxu0 0.0
    %279 = vmatprep.subr.mxu0 0.0
    %280 = vmatpush1.msra.mxu0 0.0
    %281 = vmatprep.subr.mxu0 0.0
    %282 = vmatpush1.msra.mxu0 0.0
    %283 = vmatprep.subr.mxu0 0.0
    %284 = vmatpush1.msra.mxu0 0.0
    %285 = vmatprep.subr.mxu0 0.0
    %286 = vmatpush1.msra.mxu0 0.0
    %287 = vmatprep.subr.mxu0 0.0
    %288 = vmatpush1.msra.mxu0 0.0
    %289 = vmatprep.subr.mxu0 0.0
    %290 = vmatpush1.msra.mxu0 0.0
    %291 = vmatprep.subr.mxu0 0.0
    %292 = vmatpush1.msra.mxu0 0.0
    %293 = vmatprep.subr.mxu0 0.0
    %294 = vmatpush1.msra.mxu0 0.0
    %295 = vmatprep.subr.mxu0 0.0
    %296 = vmatpush1.msra.mxu0 0.0
    %297 = vmatprep.subr.mxu0 0.0
    %298 = vmatpush1.msra.mxu0 0.0
    %299 = vmatprep.mubr.f32.mxu0 0.0
    %v300 = vand.u32 %v53, 4294901760
    %v301 = vsub.f32 %v53, %v300
    %302 = vmatmul.mubr.f32.gmra.mrb[0].mxu0 %v301
    %v303 = vpop.f32.mrb[0].mxu0
    %v304 = vadd.f32 %v223, %v303
    %v305 = vpop.f32.mrb[0].mxu0
    %v306 = vadd.f32 %v225, %v305
    %307 = vdwg.mxu0
    %v308 = vand.u32 %v42, 4294901760
    %309 = vmatprep.subr.mxu0 %v308
    %v310 = vand.u32 %v41, 4294901760
    %311 = vmatpush1.msra.mxu0 %v310
    %v312 = vand.u32 %v44, 4294901760
    %313 = vmatprep.subr.mxu0 %v312
    %v314 = vand.u32 %v43, 4294901760
    %315 = vmatpush1.msra.mxu0 %v314
    %316 = vmatprep.subr.mxu0 0.0
    %317 = vmatpush1.msra.mxu0 0.0
    %318 = vmatprep.subr.mxu0 0.0
    %319 = vmatpush1.msra.mxu0 0.0
    %320 = vmatprep.subr.mxu0 0.0
    %321 = vmatpush1.msra.mxu0 0.0
    %322 = vmatprep.subr.mxu0 0.0
    %323 = vmatpush1.msra.mxu0 0.0
    %324 = vmatprep.subr.mxu0 0.0
    %325 = vmatpush1.msra.mxu0 0.0
    %326 = vmatprep.subr.mxu0 0.0
    %327 = vmatpush1.msra.mxu0 0.0
    %328 = vmatprep.subr.mxu0 0.0
    %329 = vmatpush1.msra.mxu0 0.0
    %330 = vmatprep.subr.mxu0 0.0
    %331 = vmatpush1.msra.mxu0 0.0
    %332 = vmatprep.subr.mxu0 0.0
    %333 = vmatpush1.msra.mxu0 0.0
    %334 = vmatprep.subr.mxu0 0.0
    %335 = vmatpush1.msra.mxu0 0.0
    %336 = vmatprep.subr.mxu0 0.0
    %337 = vmatpush1.msra.mxu0 0.0
    %338 = vmatprep.subr.mxu0 0.0
    %339 = vmatpush1.msra.mxu0 0.0
    %340 = vmatprep.subr.mxu0 0.0
    %341 = vmatpush1.msra.mxu0 0.0
    %342 = vmatprep.subr.mxu0 0.0
    %343 = vmatpush1.msra.mxu0 0.0
    %344 = vmatprep.subr.mxu0 0.0
    %345 = vmatpush1.msra.mxu0 0.0
    %346 = vmatprep.subr.mxu0 0.0
    %347 = vmatpush1.msra.mxu0 0.0
    %348 = vmatprep.subr.mxu0 0.0
    %349 = vmatpush1.msra.mxu0 0.0
    %350 = vmatprep.subr.mxu0 0.0
    %351 = vmatpush1.msra.mxu0 0.0
    %352 = vmatprep.subr.mxu0 0.0
    %353 = vmatpush1.msra.mxu0 0.0
    %354 = vmatprep.subr.mxu0 0.0
    %355 = vmatpush1.msra.mxu0 0.0
    %356 = vmatprep.subr.mxu0 0.0
    %357 = vmatpush1.msra.mxu0 0.0
    %358 = vmatprep.subr.mxu0 0.0
    %359 = vmatpush1.msra.mxu0 0.0
    %360 = vmatprep.subr.mxu0 0.0
    %361 = vmatpush1.msra.mxu0 0.0
    %362 = vmatprep.subr.mxu0 0.0
    %363 = vmatpush1.msra.mxu0 0.0
    %364 = vmatprep.subr.mxu0 0.0
    %365 = vmatpush1.msra.mxu0 0.0
    %366 = vmatprep.subr.mxu0 0.0
    %367 = vmatpush1.msra.mxu0 0.0
    %368 = vmatprep.subr.mxu0 0.0
    %369 = vmatpush1.msra.mxu0 0.0
    %370 = vmatprep.subr.mxu0 0.0
    %371 = vmatpush1.msra.mxu0 0.0
    %372 = vmatprep.subr.mxu0 0.0
    %373 = vmatpush1.msra.mxu0 0.0
    %374 = vmatprep.subr.mxu0 0.0
    %375 = vmatpush1.msra.mxu0 0.0
    %376 = vmatprep.mubr.f32.mxu0 0.0
    %v377 = vand.u32 %v53, 4294901760
    %v378 = vsub.f32 %v53, %v377
    %v379 = vand.u32 %v378, 4294901760
    %380 = vmatmul.mubr.f32.gmra.mrb[0].mxu0 %v379
    %v381 = vpop.f32.mrb[0].mxu0
    %v382 = vadd.f32 %v304, %v381
    %v383 = vpop.f32.mrb[0].mxu0
    %v384 = vadd.f32 %v306, %v383
    %385 = vdwg.mxu0
    %v386 = vand.u32 %v42, 4294901760
    %v387 = vsub.f32 %v42, %v386
    %v388 = vand.u32 %v387, 4294901760
    %389 = vmatprep.subr.mxu0 %v388
    %v390 = vand.u32 %v41, 4294901760
    %v391 = vsub.f32 %v41, %v390
    %v392 = vand.u32 %v391, 4294901760
    %393 = vmatpush1.msra.mxu0 %v392
    %v394 = vand.u32 %v44, 4294901760
    %v395 = vsub.f32 %v44, %v394
    %v396 = vand.u32 %v395, 4294901760
    %397 = vmatprep.subr.mxu0 %v396
    %v398 = vand.u32 %v43, 4294901760
    %v399 = vsub.f32 %v43, %v398
    %v400 = vand.u32 %v399, 4294901760
    %401 = vmatpush1.msra.mxu0 %v400
    %402 = vmatprep.subr.mxu0 0.0
    %403 = vmatpush1.msra.mxu0 0.0
    %404 = vmatprep.subr.mxu0 0.0
    %405 = vmatpush1.msra.mxu0 0.0
    %406 = vmatprep.subr.mxu0 0.0
    %407 = vmatpush1.msra.mxu0 0.0
    %408 = vmatprep.subr.mxu0 0.0
    %409 = vmatpush1.msra.mxu0 0.0
    %410 = vmatprep.subr.mxu0 0.0
    %411 = vmatpush1.msra.mxu0 0.0
    %412 = vmatprep.subr.mxu0 0.0
    %413 = vmatpush1.msra.mxu0 0.0
    %414 = vmatprep.subr.mxu0 0.0
    %415 = vmatpush1.msra.mxu0 0.0
    %416 = vmatprep.subr.mxu0 0.0
    %417 = vmatpush1.msra.mxu0 0.0
    %418 = vmatprep.subr.mxu0 0.0
    %419 = vmatpush1.msra.mxu0 0.0
    %420 = vmatprep.subr.mxu0 0.0
    %421 = vmatpush1.msra.mxu0 0.0
    %422 = vmatprep.subr.mxu0 0.0
    %423 = vmatpush1.msra.mxu0 0.0
    %424 = vmatprep.subr.mxu0 0.0
    %425 = vmatpush1.msra.mxu0 0.0
    %426 = vmatprep.subr.mxu0 0.0
    %427 = vmatpush1.msra.mxu0 0.0
    %428 = vmatprep.subr.mxu0 0.0
    %429 = vmatpush1.msra.mxu0 0.0
    %430 = vmatprep.subr.mxu0 0.0
    %431 = vmatpush1.msra.mxu0 0.0
    %432 = vmatprep.subr.mxu0 0.0
    %433 = vmatpush1.msra.mxu0 0.0
    %434 = vmatprep.subr.mxu0 0.0
    %435 = vmatpush1.msra.mxu0 0.0
    %436 = vmatprep.subr.mxu0 0.0
    %437 = vmatpush1.msra.mxu0 0.0
    %438 = vmatprep.subr.mxu0 0.0
    %439 = vmatpush1.msra.mxu0 0.0
    %440 = vmatprep.subr.mxu0 0.0
    %441 = vmatpush1.msra.mxu0 0.0
    %442 = vmatprep.subr.mxu0 0.0
    %443 = vmatpush1.msra.mxu0 0.0
    %444 = vmatprep.subr.mxu0 0.0
    %445 = vmatpush1.msra.mxu0 0.0
    %446 = vmatprep.subr.mxu0 0.0
    %447 = vmatpush1.msra.mxu0 0.0
    %448 = vmatprep.subr.mxu0 0.0
    %449 = vmatpush1.msra.mxu0 0.0
    %450 = vmatprep.subr.mxu0 0.0
    %451 = vmatpush1.msra.mxu0 0.0
    %452 = vmatprep.subr.mxu0 0.0
    %453 = vmatpush1.msra.mxu0 0.0
    %454 = vmatprep.subr.mxu0 0.0
    %455 = vmatpush1.msra.mxu0 0.0
    %456 = vmatprep.subr.mxu0 0.0
    %457 = vmatpush1.msra.mxu0 0.0
    %458 = vmatprep.subr.mxu0 0.0
    %459 = vmatpush1.msra.mxu0 0.0
    %460 = vmatprep.subr.mxu0 0.0
    %461 = vmatpush1.msra.mxu0 0.0
    %462 = vmatprep.mubr.f32.mxu0 0.0
    %v463 = vand.u32 %v53, 4294901760
    %464 = vmatmul.mubr.f32.gmra.mrb[0].mxu0 %v463
    %v465 = vpop.f32.mrb[0].mxu0
    %v466 = vadd.f32 %v382, %v465
    %v467 = vpop.f32.mrb[0].mxu0
    %v468 = vadd.f32 %v384, %v467
    %469 = vdwg.mxu0
    %v470 = vand.u32 %v42, 4294901760
    %471 = vmatprep.subr.mxu0 %v470
    %v472 = vand.u32 %v41, 4294901760
    %473 = vmatpush1.msra.mxu0 %v472
    %v474 = vand.u32 %v44, 4294901760
    %475 = vmatprep.subr.mxu0 %v474
    %v476 = vand.u32 %v43, 4294901760
    %477 = vmatpush1.msra.mxu0 %v476
    %478 = vmatprep.subr.mxu0 0.0
    %479 = vmatpush1.msra.mxu0 0.0
    %480 = vmatprep.subr.mxu0 0.0
    %481 = vmatpush1.msra.mxu0 0.0
    %482 = vmatprep.subr.mxu0 0.0
    %483 = vmatpush1.msra.mxu0 0.0
    %484 = vmatprep.subr.mxu0 0.0
    %485 = vmatpush1.msra.mxu0 0.0
    %486 = vmatprep.subr.mxu0 0.0
    %487 = vmatpush1.msra.mxu0 0.0
    %488 = vmatprep.subr.mxu0 0.0
    %489 = vmatpush1.msra.mxu0 0.0
    %490 = vmatprep.subr.mxu0 0.0
    %491 = vmatpush1.msra.mxu0 0.0
    %492 = vmatprep.subr.mxu0 0.0
    %493 = vmatpush1.msra.mxu0 0.0
    %494 = vmatprep.subr.mxu0 0.0
    %495 = vmatpush1.msra.mxu0 0.0
    %496 = vmatprep.subr.mxu0 0.0
    %497 = vmatpush1.msra.mxu0 0.0
    %498 = vmatprep.subr.mxu0 0.0
    %499 = vmatpush1.msra.mxu0 0.0
    %500 = vmatprep.subr.mxu0 0.0
    %501 = vmatpush1.msra.mxu0 0.0
    %502 = vmatprep.subr.mxu0 0.0
    %503 = vmatpush1.msra.mxu0 0.0
    %504 = vmatprep.subr.mxu0 0.0
    %505 = vmatpush1.msra.mxu0 0.0
    %506 = vmatprep.subr.mxu0 0.0
    %507 = vmatpush1.msra.mxu0 0.0
    %508 = vmatprep.subr.mxu0 0.0
    %509 = vmatpush1.msra.mxu0 0.0
    %510 = vmatprep.subr.mxu0 0.0
    %511 = vmatpush1.msra.mxu0 0.0
    %512 = vmatprep.subr.mxu0 0.0
    %513 = vmatpush1.msra.mxu0 0.0
    %514 = vmatprep.subr.mxu0 0.0
    %515 = vmatpush1.msra.mxu0 0.0
    %516 = vmatprep.subr.mxu0 0.0
    %517 = vmatpush1.msra.mxu0 0.0
    %518 = vmatprep.subr.mxu0 0.0
    %519 = vmatpush1.msra.mxu0 0.0
    %520 = vmatprep.subr.mxu0 0.0
    %521 = vmatpush1.msra.mxu0 0.0
    %522 = vmatprep.subr.mxu0 0.0
    %523 = vmatpush1.msra.mxu0 0.0
    %524 = vmatprep.subr.mxu0 0.0
    %525 = vmatpush1.msra.mxu0 0.0
    %526 = vmatprep.subr.mxu0 0.0
    %527 = vmatpush1.msra.mxu0 0.0
    %528 = vmatprep.subr.mxu0 0.0
    %529 = vmatpush1.msra.mxu0 0.0
    %530 = vmatprep.subr.mxu0 0.0
    %531 = vmatpush1.msra.mxu0 0.0
    %532 = vmatprep.subr.mxu0 0.0
    %533 = vmatpush1.msra.mxu0 0.0
    %534 = vmatprep.subr.mxu0 0.0
    %535 = vmatpush1.msra.mxu0 0.0
    %536 = vmatprep.subr.mxu0 0.0
    %537 = vmatpush1.msra.mxu0 0.0
    %538 = vmatprep.mubr.f32.mxu0 0.0
    %v539 = vand.u32 %v53, 4294901760
    %540 = vmatmul.mubr.f32.gmra.mrb[0].mxu0 %v539
    %v541 = vpop.f32.mrb[0].mxu0
    %v542 = vadd.f32 %v466, %v541
    %v543 = vpop.f32.mrb[0].mxu0
    %v544 = vadd.f32 %v468, %v543
    %545 = vdwg.mxu0
    %547 = vset.pattern.permute.xlu0 0
    %548 = vperm.xlu0 %547, %v49
    %v549 = vpop.permute.xlu0 %548
    %v552 = vsel %vm51, %v45, 0
    %v554 = vand.u32 %v42, 4294901760
    %555 = vmatprep.subr.mxu0 %v554
    %v556 = vand.u32 %v41, 4294901760
    %557 = vmatpush1.msra.mxu0 %v556
    %v558 = vand.u32 %v44, 4294901760
    %559 = vmatprep.subr.mxu0 %v558
    %v560 = vand.u32 %v43, 4294901760
    %561 = vmatpush1.msra.mxu0 %v560
    %562 = vmatprep.subr.mxu0 0.0
    %563 = vmatpush1.msra.mxu0 0.0
    %564 = vmatprep.subr.mxu0 0.0
    %565 = vmatpush1.msra.mxu0 0.0
    %566 = vmatprep.subr.mxu0 0.0
    %567 = vmatpush1.msra.mxu0 0.0
    %568 = vmatprep.subr.mxu0 0.0
    %569 = vmatpush1.msra.mxu0 0.0
    %570 = vmatprep.subr.mxu0 0.0
    %571 = vmatpush1.msra.mxu0 0.0
    %572 = vmatprep.subr.mxu0 0.0
    %573 = vmatpush1.msra.mxu0 0.0
    %574 = vmatprep.subr.mxu0 0.0
    %575 = vmatpush1.msra.mxu0 0.0
    %576 = vmatprep.subr.mxu0 0.0
    %577 = vmatpush1.msra.mxu0 0.0
    %578 = vmatprep.subr.mxu0 0.0
    %579 = vmatpush1.msra.mxu0 0.0
    %580 = vmatprep.subr.mxu0 0.0
    %581 = vmatpush1.msra.mxu0 0.0
    %582 = vmatprep.subr.mxu0 0.0
    %583 = vmatpush1.msra.mxu0 0.0
    %584 = vmatprep.subr.mxu0 0.0
    %585 = vmatpush1.msra.mxu0 0.0
    %586 = vmatprep.subr.mxu0 0.0
    %587 = vmatpush1.msra.mxu0 0.0
    %588 = vmatprep.subr.mxu0 0.0
    %589 = vmatpush1.msra.mxu0 0.0
    %590 = vmatprep.subr.mxu0 0.0
    %591 = vmatpush1.msra.mxu0 0.0
    %592 = vmatprep.subr.mxu0 0.0
    %593 = vmatpush1.msra.mxu0 0.0
    %594 = vmatprep.subr.mxu0 0.0
    %595 = vmatpush1.msra.mxu0 0.0
    %596 = vmatprep.subr.mxu0 0.0
    %597 = vmatpush1.msra.mxu0 0.0
    %598 = vmatprep.subr.mxu0 0.0
    %599 = vmatpush1.msra.mxu0 0.0
    %600 = vmatprep.subr.mxu0 0.0
    %601 = vmatpush1.msra.mxu0 0.0
    %602 = vmatprep.subr.mxu0 0.0
    %603 = vmatpush1.msra.mxu0 0.0
    %604 = vmatprep.subr.mxu0 0.0
    %605 = vmatpush1.msra.mxu0 0.0
    %606 = vmatprep.subr.mxu0 0.0
    %607 = vmatpush1.msra.mxu0 0.0
    %608 = vmatprep.subr.mxu0 0.0
    %609 = vmatpush1.msra.mxu0 0.0
    %610 = vmatprep.subr.mxu0 0.0
    %611 = vmatpush1.msra.mxu0 0.0
    %612 = vmatprep.subr.mxu0 0.0
    %613 = vmatpush1.msra.mxu0 0.0
    %614 = vmatprep.subr.mxu0 0.0
    %615 = vmatpush1.msra.mxu0 0.0
    %616 = vmatprep.subr.mxu0 0.0
    %617 = vmatpush1.msra.mxu0 0.0
    %618 = vmatprep.subr.mxu0 0.0
    %619 = vmatpush1.msra.mxu0 0.0
    %620 = vmatprep.subr.mxu0 0.0
    %621 = vmatpush1.msra.mxu0 0.0
    %622 = vmatprep.mubr.f32.mxu0 0.0
    %v623 = vand.u32 %v552, 4294901760
    %v624 = vsub.f32 %v552, %v623
    %v625 = vand.u32 %v624, 4294901760
    %v626 = vsub.f32 %v624, %v625
    %v627 = vand.u32 %v626, 4294901760
    %628 = vmatmul.mubr.f32.gmra.mrb[0].mxu0 %v627
    %v629 = vpop.f32.mrb[0].mxu0
    %v630 = vadd.f32 %v549, %v629
    %v631 = vpop.f32.mrb[0].mxu0
    %v632 = vadd.f32 %v549, %v631
    %633 = vdwg.mxu0
    %v634 = vand.u32 %v42, 4294901760
    %v635 = vsub.f32 %v42, %v634
    %v636 = vand.u32 %v635, 4294901760
    %v637 = vsub.f32 %v635, %v636
    %v638 = vand.u32 %v637, 4294901760
    %639 = vmatprep.subr.mxu0 %v638
    %v640 = vand.u32 %v41, 4294901760
    %v641 = vsub.f32 %v41, %v640
    %v642 = vand.u32 %v641, 4294901760
    %v643 = vsub.f32 %v641, %v642
    %v644 = vand.u32 %v643, 4294901760
    %645 = vmatpush1.msra.mxu0 %v644
    %v646 = vand.u32 %v44, 4294901760
    %v647 = vsub.f32 %v44, %v646
    %v648 = vand.u32 %v647, 4294901760
    %v649 = vsub.f32 %v647, %v648
    %v650 = vand.u32 %v649, 4294901760
    %651 = vmatprep.subr.mxu0 %v650
    %v652 = vand.u32 %v43, 4294901760
    %v653 = vsub.f32 %v43, %v652
    %v654 = vand.u32 %v653, 4294901760
    %v655 = vsub.f32 %v653, %v654
    %v656 = vand.u32 %v655, 4294901760
    %657 = vmatpush1.msra.mxu0 %v656
    %658 = vmatprep.subr.mxu0 0.0
    %659 = vmatpush1.msra.mxu0 0.0
    %660 = vmatprep.subr.mxu0 0.0
    %661 = vmatpush1.msra.mxu0 0.0
    %662 = vmatprep.subr.mxu0 0.0
    %663 = vmatpush1.msra.mxu0 0.0
    %664 = vmatprep.subr.mxu0 0.0
    %665 = vmatpush1.msra.mxu0 0.0
    %666 = vmatprep.subr.mxu0 0.0
    %667 = vmatpush1.msra.mxu0 0.0
    %668 = vmatprep.subr.mxu0 0.0
    %669 = vmatpush1.msra.mxu0 0.0
    %670 = vmatprep.subr.mxu0 0.0
    %671 = vmatpush1.msra.mxu0 0.0
    %672 = vmatprep.subr.mxu0 0.0
    %673 = vmatpush1.msra.mxu0 0.0
    %674 = vmatprep.subr.mxu0 0.0
    %675 = vmatpush1.msra.mxu0 0.0
    %676 = vmatprep.subr.mxu0 0.0
    %677 = vmatpush1.msra.mxu0 0.0
    %678 = vmatprep.subr.mxu0 0.0
    %679 = vmatpush1.msra.mxu0 0.0
    %680 = vmatprep.subr.mxu0 0.0
    %681 = vmatpush1.msra.mxu0 0.0
    %682 = vmatprep.subr.mxu0 0.0
    %683 = vmatpush1.msra.mxu0 0.0
    %684 = vmatprep.subr.mxu0 0.0
    %685 = vmatpush1.msra.mxu0 0.0
    %686 = vmatprep.subr.mxu0 0.0
    %687 = vmatpush1.msra.mxu0 0.0
    %688 = vmatprep.subr.mxu0 0.0
    %689 = vmatpush1.msra.mxu0 0.0
    %690 = vmatprep.subr.mxu0 0.0
    %691 = vmatpush1.msra.mxu0 0.0
    %692 = vmatprep.subr.mxu0 0.0
    %693 = vmatpush1.msra.mxu0 0.0
    %694 = vmatprep.subr.mxu0 0.0
    %695 = vmatpush1.msra.mxu0 0.0
    %696 = vmatprep.subr.mxu0 0.0
    %697 = vmatpush1.msra.mxu0 0.0
    %698 = vmatprep.subr.mxu0 0.0
    %699 = vmatpush1.msra.mxu0 0.0
    %700 = vmatprep.subr.mxu0 0.0
    %701 = vmatpush1.msra.mxu0 0.0
    %702 = vmatprep.subr.mxu0 0.0
    %703 = vmatpush1.msra.mxu0 0.0
    %704 = vmatprep.subr.mxu0 0.0
    %705 = vmatpush1.msra.mxu0 0.0
    %706 = vmatprep.subr.mxu0 0.0
    %707 = vmatpush1.msra.mxu0 0.0
    %708 = vmatprep.subr.mxu0 0.0
    %709 = vmatpush1.msra.mxu0 0.0
    %710 = vmatprep.subr.mxu0 0.0
    %711 = vmatpush1.msra.mxu0 0.0
    %712 = vmatprep.subr.mxu0 0.0
    %713 = vmatpush1.msra.mxu0 0.0
    %714 = vmatprep.subr.mxu0 0.0
    %715 = vmatpush1.msra.mxu0 0.0
    %716 = vmatprep.subr.mxu0 0.0
    %717 = vmatpush1.msra.mxu0 0.0
    %718 = vmatprep.mubr.f32.mxu0 0.0
    %v719 = vand.u32 %v552, 4294901760
    %720 = vmatmul.mubr.f32.gmra.mrb[0].mxu0 %v719
    %v721 = vpop.f32.mrb[0].mxu0
    %v722 = vadd.f32 %v630, %v721
    %v723 = vpop.f32.mrb[0].mxu0
    %v724 = vadd.f32 %v632, %v723
    %725 = vdwg.mxu0
    %v726 = vand.u32 %v42, 4294901760
    %v727 = vsub.f32 %v42, %v726
    %728 = vmatprep.subr.mxu0 %v727
    %v729 = vand.u32 %v41, 4294901760
    %v730 = vsub.f32 %v41, %v729
    %731 = vmatpush1.msra.mxu0 %v730
    %v732 = vand.u32 %v44, 4294901760
    %v733 = vsub.f32 %v44, %v732
    %734 = vmatprep.subr.mxu0 %v733
    %v735 = vand.u32 %v43, 4294901760
    %v736 = vsub.f32 %v43, %v735
    %737 = vmatpush1.msra.mxu0 %v736
    %738 = vmatprep.subr.mxu0 0.0
    %739 = vmatpush1.msra.mxu0 0.0
    %740 = vmatprep.subr.mxu0 0.0
    %741 = vmatpush1.msra.mxu0 0.0
    %742 = vmatprep.subr.mxu0 0.0
    %743 = vmatpush1.msra.mxu0 0.0
    %744 = vmatprep.subr.mxu0 0.0
    %745 = vmatpush1.msra.mxu0 0.0
    %746 = vmatprep.subr.mxu0 0.0
    %747 = vmatpush1.msra.mxu0 0.0
    %748 = vmatprep.subr.mxu0 0.0
    %749 = vmatpush1.msra.mxu0 0.0
    %750 = vmatprep.subr.mxu0 0.0
    %751 = vmatpush1.msra.mxu0 0.0
    %752 = vmatprep.subr.mxu0 0.0
    %753 = vmatpush1.msra.mxu0 0.0
    %754 = vmatprep.subr.mxu0 0.0
    %755 = vmatpush1.msra.mxu0 0.0
    %756 = vmatprep.subr.mxu0 0.0
    %757 = vmatpush1.msra.mxu0 0.0
    %758 = vmatprep.subr.mxu0 0.0
    %759 = vmatpush1.msra.mxu0 0.0
    %760 = vmatprep.subr.mxu0 0.0
    %761 = vmatpush1.msra.mxu0 0.0
    %762 = vmatprep.subr.mxu0 0.0
    %763 = vmatpush1.msra.mxu0 0.0
    %764 = vmatprep.subr.mxu0 0.0
    %765 = vmatpush1.msra.mxu0 0.0
    %766 = vmatprep.subr.mxu0 0.0
    %767 = vmatpush1.msra.mxu0 0.0
    %768 = vmatprep.subr.mxu0 0.0
    %769 = vmatpush1.msra.mxu0 0.0
    %770 = vmatprep.subr.mxu0 0.0
    %771 = vmatpush1.msra.mxu0 0.0
    %772 = vmatprep.subr.mxu0 0.0
    %773 = vmatpush1.msra.mxu0 0.0
    %774 = vmatprep.subr.mxu0 0.0
    %775 = vmatpush1.msra.mxu0 0.0
    %776 = vmatprep.subr.mxu0 0.0
    %777 = vmatpush1.msra.mxu0 0.0
    %778 = vmatprep.subr.mxu0 0.0
    %779 = vmatpush1.msra.mxu0 0.0
    %780 = vmatprep.subr.mxu0 0.0
    %781 = vmatpush1.msra.mxu0 0.0
    %782 = vmatprep.subr.mxu0 0.0
    %783 = vmatpush1.msra.mxu0 0.0
    %784 = vmatprep.subr.mxu0 0.0
    %785 = vmatpush1.msra.mxu0 0.0
    %786 = vmatprep.subr.mxu0 0.0
    %787 = vmatpush1.msra.mxu0 0.0
    %788 = vmatprep.subr.mxu0 0.0
    %789 = vmatpush1.msra.mxu0 0.0
    %790 = vmatprep.subr.mxu0 0.0
    %791 = vmatpush1.msra.mxu0 0.0
    %792 = vmatprep.subr.mxu0 0.0
    %793 = vmatpush1.msra.mxu0 0.0
    %794 = vmatprep.subr.mxu0 0.0
    %795 = vmatpush1.msra.mxu0 0.0
    %796 = vmatprep.subr.mxu0 0.0
    %797 = vmatpush1.msra.mxu0 0.0
    %798 = vmatprep.mubr.f32.mxu0 0.0
    %v799 = vand.u32 %v552, 4294901760
    %v800 = vsub.f32 %v552, %v799
    %801 = vmatmul.mubr.f32.gmra.mrb[0].mxu0 %v800
    %v802 = vpop.f32.mrb[0].mxu0
    %v803 = vadd.f32 %v722, %v802
    %v804 = vpop.f32.mrb[0].mxu0
    %v805 = vadd.f32 %v724, %v804
    %806 = vdwg.mxu0
    %v807 = vand.u32 %v42, 4294901760
    %808 = vmatprep.subr.mxu0 %v807
    %v809 = vand.u32 %v41, 4294901760
    %810 = vmatpush1.msra.mxu0 %v809
    %v811 = vand.u32 %v44, 4294901760
    %812 = vmatprep.subr.mxu0 %v811
    %v813 = vand.u32 %v43, 4294901760
    %814 = vmatpush1.msra.mxu0 %v813
    %815 = vmatprep.subr.mxu0 0.0
    %816 = vmatpush1.msra.mxu0 0.0
    %817 = vmatprep.subr.mxu0 0.0
    %818 = vmatpush1.msra.mxu0 0.0
    %819 = vmatprep.subr.mxu0 0.0
    %820 = vmatpush1.msra.mxu0 0.0
    %821 = vmatprep.subr.mxu0 0.0
    %822 = vmatpush1.msra.mxu0 0.0
    %823 = vmatprep.subr.mxu0 0.0
    %824 = vmatpush1.msra.mxu0 0.0
    %825 = vmatprep.subr.mxu0 0.0
    %826 = vmatpush1.msra.mxu0 0.0
    %827 = vmatprep.subr.mxu0 0.0
    %828 = vmatpush1.msra.mxu0 0.0
    %829 = vmatprep.subr.mxu0 0.0
    %830 = vmatpush1.msra.mxu0 0.0
    %831 = vmatprep.subr.mxu0 0.0
    %832 = vmatpush1.msra.mxu0 0.0
    %833 = vmatprep.subr.mxu0 0.0
    %834 = vmatpush1.msra.mxu0 0.0
    %835 = vmatprep.subr.mxu0 0.0
    %836 = vmatpush1.msra.mxu0 0.0
    %837 = vmatprep.subr.mxu0 0.0
    %838 = vmatpush1.msra.mxu0 0.0
    %839 = vmatprep.subr.mxu0 0.0
    %840 = vmatpush1.msra.mxu0 0.0
    %841 = vmatprep.subr.mxu0 0.0
    %842 = vmatpush1.msra.mxu0 0.0
    %843 = vmatprep.subr.mxu0 0.0
    %844 = vmatpush1.msra.mxu0 0.0
    %845 = vmatprep.subr.mxu0 0.0
    %846 = vmatpush1.msra.mxu0 0.0
    %847 = vmatprep.subr.mxu0 0.0
    %848 = vmatpush1.msra.mxu0 0.0
    %849 = vmatprep.subr.mxu0 0.0
    %850 = vmatpush1.msra.mxu0 0.0
    %851 = vmatprep.subr.mxu0 0.0
    %852 = vmatpush1.msra.mxu0 0.0
    %853 = vmatprep.subr.mxu0 0.0
    %854 = vmatpush1.msra.mxu0 0.0
    %855 = vmatprep.subr.mxu0 0.0
    %856 = vmatpush1.msra.mxu0 0.0
    %857 = vmatprep.subr.mxu0 0.0
    %858 = vmatpush1.msra.mxu0 0.0
    %859 = vmatprep.subr.mxu0 0.0
    %860 = vmatpush1.msra.mxu0 0.0
    %861 = vmatprep.subr.mxu0 0.0
    %862 = vmatpush1.msra.mxu0 0.0
    %863 = vmatprep.subr.mxu0 0.0
    %864 = vmatpush1.msra.mxu0 0.0
    %865 = vmatprep.subr.mxu0 0.0
    %866 = vmatpush1.msra.mxu0 0.0
    %867 = vmatprep.subr.mxu0 0.0
    %868 = vmatpush1.msra.mxu0 0.0
    %869 = vmatprep.subr.mxu0 0.0
    %870 = vmatpush1.msra.mxu0 0.0
    %871 = vmatprep.subr.mxu0 0.0
    %872 = vmatpush1.msra.mxu0 0.0
    %873 = vmatprep.subr.mxu0 0.0
    %874 = vmatpush1.msra.mxu0 0.0
    %875 = vmatprep.mubr.f32.mxu0 0.0
    %v876 = vand.u32 %v552, 4294901760
    %v877 = vsub.f32 %v552, %v876
    %v878 = vand.u32 %v877, 4294901760
    %879 = vmatmul.mubr.f32.gmra.mrb[0].mxu0 %v878
    %v880 = vpop.f32.mrb[0].mxu0
    %v881 = vadd.f32 %v803, %v880
    %v882 = vpop.f32.mrb[0].mxu0
    %v883 = vadd.f32 %v805, %v882
    %884 = vdwg.mxu0
    %v885 = vand.u32 %v42, 4294901760
    %v886 = vsub.f32 %v42, %v885
    %v887 = vand.u32 %v886, 4294901760
    %888 = vmatprep.subr.mxu0 %v887
    %v889 = vand.u32 %v41, 4294901760
    %v890 = vsub.f32 %v41, %v889
    %v891 = vand.u32 %v890, 4294901760
    %892 = vmatpush1.msra.mxu0 %v891
    %v893 = vand.u32 %v44, 4294901760
    %v894 = vsub.f32 %v44, %v893
    %v895 = vand.u32 %v894, 4294901760
    %896 = vmatprep.subr.mxu0 %v895
    %v897 = vand.u32 %v43, 4294901760
    %v898 = vsub.f32 %v43, %v897
    %v899 = vand.u32 %v898, 4294901760
    %900 = vmatpush1.msra.mxu0 %v899
    %901 = vmatprep.subr.mxu0 0.0
    %902 = vmatpush1.msra.mxu0 0.0
    %903 = vmatprep.subr.mxu0 0.0
    %904 = vmatpush1.msra.mxu0 0.0
    %905 = vmatprep.subr.mxu0 0.0
    %906 = vmatpush1.msra.mxu0 0.0
    %907 = vmatprep.subr.mxu0 0.0
    %908 = vmatpush1.msra.mxu0 0.0
    %909 = vmatprep.subr.mxu0 0.0
    %910 = vmatpush1.msra.mxu0 0.0
    %911 = vmatprep.subr.mxu0 0.0
    %912 = vmatpush1.msra.mxu0 0.0
    %913 = vmatprep.subr.mxu0 0.0
    %914 = vmatpush1.msra.mxu0 0.0
    %915 = vmatprep.subr.mxu0 0.0
    %916 = vmatpush1.msra.mxu0 0.0
    %917 = vmatprep.subr.mxu0 0.0
    %918 = vmatpush1.msra.mxu0 0.0
    %919 = vmatprep.subr.mxu0 0.0
    %920 = vmatpush1.msra.mxu0 0.0
    %921 = vmatprep.subr.mxu0 0.0
    %922 = vmatpush1.msra.mxu0 0.0
    %923 = vmatprep.subr.mxu0 0.0
    %924 = vmatpush1.msra.mxu0 0.0
    %925 = vmatprep.subr.mxu0 0.0
    %926 = vmatpush1.msra.mxu0 0.0
    %927 = vmatprep.subr.mxu0 0.0
    %928 = vmatpush1.msra.mxu0 0.0
    %929 = vmatprep.subr.mxu0 0.0
    %930 = vmatpush1.msra.mxu0 0.0
    %931 = vmatprep.subr.mxu0 0.0
    %932 = vmatpush1.msra.mxu0 0.0
    %933 = vmatprep.subr.mxu0 0.0
    %934 = vmatpush1.msra.mxu0 0.0
    %935 = vmatprep.subr.mxu0 0.0
    %936 = vmatpush1.msra.mxu0 0.0
    %937 = vmatprep.subr.mxu0 0.0
    %938 = vmatpush1.msra.mxu0 0.0
    %939 = vmatprep.subr.mxu0 0.0
    %940 = vmatpush1.msra.mxu0 0.0
    %941 = vmatprep.subr.mxu0 0.0
    %942 = vmatpush1.msra.mxu0 0.0
    %943 = vmatprep.subr.mxu0 0.0
    %944 = vmatpush1.msra.mxu0 0.0
    %945 = vmatprep.subr.mxu0 0.0
    %946 = vmatpush1.msra.mxu0 0.0
    %947 = vmatprep.subr.mxu0 0.0
    %948 = vmatpush1.msra.mxu0 0.0
    %949 = vmatprep.subr.mxu0 0.0
    %950 = vmatpush1.msra.mxu0 0.0
    %951 = vmatprep.subr.mxu0 0.0
    %952 = vmatpush1.msra.mxu0 0.0
    %953 = vmatprep.subr.mxu0 0.0
    %954 = vmatpush1.msra.mxu0 0.0
    %955 = vmatprep.subr.mxu0 0.0
    %956 = vmatpush1.msra.mxu0 0.0
    %957 = vmatprep.subr.mxu0 0.0
    %958 = vmatpush1.msra.mxu0 0.0
    %959 = vmatprep.subr.mxu0 0.0
    %960 = vmatpush1.msra.mxu0 0.0
    %961 = vmatprep.mubr.f32.mxu0 0.0
    %v962 = vand.u32 %v552, 4294901760
    %963 = vmatmul.mubr.f32.gmra.mrb[0].mxu0 %v962
    %v964 = vpop.f32.mrb[0].mxu0
    %v965 = vadd.f32 %v881, %v964
    %v966 = vpop.f32.mrb[0].mxu0
    %v967 = vadd.f32 %v883, %v966
    %968 = vdwg.mxu0
    %v969 = vand.u32 %v42, 4294901760
    %970 = vmatprep.subr.mxu0 %v969
    %v971 = vand.u32 %v41, 4294901760
    %972 = vmatpush1.msra.mxu0 %v971
    %v973 = vand.u32 %v44, 4294901760
    %974 = vmatprep.subr.mxu0 %v973
    %v975 = vand.u32 %v43, 4294901760
    %976 = vmatpush1.msra.mxu0 %v975
    %977 = vmatprep.subr.mxu0 0.0
    %978 = vmatpush1.msra.mxu0 0.0
    %979 = vmatprep.subr.mxu0 0.0
    %980 = vmatpush1.msra.mxu0 0.0
    %981 = vmatprep.subr.mxu0 0.0
    %982 = vmatpush1.msra.mxu0 0.0
    %983 = vmatprep.subr.mxu0 0.0
    %984 = vmatpush1.msra.mxu0 0.0
    %985 = vmatprep.subr.mxu0 0.0
    %986 = vmatpush1.msra.mxu0 0.0
    %987 = vmatprep.subr.mxu0 0.0
    %988 = vmatpush1.msra.mxu0 0.0
    %989 = vmatprep.subr.mxu0 0.0
    %990 = vmatpush1.msra.mxu0 0.0
    %991 = vmatprep.subr.mxu0 0.0
    %992 = vmatpush1.msra.mxu0 0.0
    %993 = vmatprep.subr.mxu0 0.0
    %994 = vmatpush1.msra.mxu0 0.0
    %995 = vmatprep.subr.mxu0 0.0
    %996 = vmatpush1.msra.mxu0 0.0
    %997 = vmatprep.subr.mxu0 0.0
    %998 = vmatpush1.msra.mxu0 0.0
    %999 = vmatprep.subr.mxu0 0.0
    %1000 = vmatpush1.msra.mxu0 0.0
    %1001 = vmatprep.subr.mxu0 0.0
    %1002 = vmatpush1.msra.mxu0 0.0
    %1003 = vmatprep.subr.mxu0 0.0
    %1004 = vmatpush1.msra.mxu0 0.0
    %1005 = vmatprep.subr.mxu0 0.0
    %1006 = vmatpush1.msra.mxu0 0.0
    %1007 = vmatprep.subr.mxu0 0.0
    %1008 = vmatpush1.msra.mxu0 0.0
    %1009 = vmatprep.subr.mxu0 0.0
    %1010 = vmatpush1.msra.mxu0 0.0
    %1011 = vmatprep.subr.mxu0 0.0
    %1012 = vmatpush1.msra.mxu0 0.0
    %1013 = vmatprep.subr.mxu0 0.0
    %1014 = vmatpush1.msra.mxu0 0.0
    %1015 = vmatprep.subr.mxu0 0.0
    %1016 = vmatpush1.msra.mxu0 0.0
    %1017 = vmatprep.subr.mxu0 0.0
    %1018 = vmatpush1.msra.mxu0 0.0
    %1019 = vmatprep.subr.mxu0 0.0
    %1020 = vmatpush1.msra.mxu0 0.0
    %1021 = vmatprep.subr.mxu0 0.0
    %1022 = vmatpush1.msra.mxu0 0.0
    %1023 = vmatprep.subr.mxu0 0.0
    %1024 = vmatpush1.msra.mxu0 0.0
    %1025 = vmatprep.subr.mxu0 0.0
    %1026 = vmatpush1.msra.mxu0 0.0
    %1027 = vmatprep.subr.mxu0 0.0
    %1028 = vmatpush1.msra.mxu0 0.0
    %1029 = vmatprep.subr.mxu0 0.0
    %1030 = vmatpush1.msra.mxu0 0.0
    %1031 = vmatprep.subr.mxu0 0.0
    %1032 = vmatpush1.msra.mxu0 0.0
    %1033 = vmatprep.subr.mxu0 0.0
    %1034 = vmatpush1.msra.mxu0 0.0
    %1035 = vmatprep.subr.mxu0 0.0
    %1036 = vmatpush1.msra.mxu0 0.0
    %1037 = vmatprep.mubr.f32.mxu0 0.0
    %v1038 = vand.u32 %v552, 4294901760
    %1039 = vmatmul.mubr.f32.gmra.mrb[0].mxu0 %v1038
    %v1040 = vpop.f32.mrb[0].mxu0
    %v1041 = vadd.f32 %v965, %v1040
    %v1042 = vpop.f32.mrb[0].mxu0
    %v1043 = vadd.f32 %v967, %v1042
    %1044 = vdwg.mxu0
    %v1045 = vmax.f32 %v1041, 0.0
    %v1046 = vmax.f32 %v1043, 0.0
    %v1047 = vlaneseq
    %v1048 = vand.u32 %v1047, 127
    %v1049 = vadd.s32 %v1048, 128
    %vm1050 = vcmp.lt.s32.totalorder %v1048, 0
    %v1051 = vsub.s32 0, %v1048
    %v1052 = vsel %vm1050, %v1051, %v1048
    %v1053 = vshrl.u32 %v1052, 4
    %v1054 = vand.u32 %v1052, 15
    %v1055 = vsub.s32 0, %v1054
    %v1056 = vsel %vm1050, %v1055, %v1054
    %vm1057 = vcmp.lt.s32.totalorder %v1049, 0
    %v1058 = vsub.s32 0, %v1049
    %v1059 = vsel %vm1057, %v1058, %v1049
    %v1060 = vshrl.u32 %v1059, 4
    %v1061 = vand.u32 %v1059, 15
    %v1062 = vsub.s32 0, %v1061
    %v1063 = vsel %vm1057, %v1062, %v1061
    %vm1064 = vcmp.ne.s32.totalorder %v1056, 0
    %vm1065 = vcmp.ne.s32.totalorder %v1063, 0
    %vm1066 = vcmp.lt.s32.totalorder %v1056, 0
    %vm1067 = vcmp.lt.s32.totalorder %v1063, 0
    %vm1068 = vmand %vm1066, %vm1064
    %vm1069 = vmand %vm1067, %vm1065
    %v1070 = vadd.s32 %v1056, 16
    %v1071 = vadd.s32 %v1063, 16
    %v1072 = vsel %vm1068, %v1070, %v1056
    %v1073 = vsel %vm1069, %v1071, %v1063
    %vm1074 = vcmp.lt.s32.totalorder %v1072, 15
    %vm1075 = vcmp.lt.s32.totalorder %v1073, 15
    %v1076 = vsel %vm1074, 1, 0
    %v1077 = vsel %vm1075, 1, 0
    %vm1078 = vcmp.eq.s32.totalorder %v1076, 1
    %vm1079 = vcmp.eq.s32.totalorder %v1077, 1
    %v1080 = vsel %vm1078, %v1045, 0.0
    %v1081 = vsel %vm1079, %v1046, 0.0
    %vm1082 = vcmp.gt.s32.totalorder %v1072, 0
    %vm1083 = vcmp.gt.s32.totalorder %v1073, 0
    %v1084 = vsel %vm1082, 1, 0
    %v1085 = vsel %vm1083, 1, 0
    %vm1086 = vcmp.eq.s32.totalorder %v1084, 1
    %vm1087 = vcmp.eq.s32.totalorder %v1085, 1
    %v1088 = vsel %vm1086, %v1045, 0.0
    %v1089 = vsel %vm1087, %v1046, 0.0
    %vm1090 = vcmp.lt.s32.totalorder %v1048, 240
    %vm1091 = vcmp.lt.s32.totalorder %v1049, 240
    %vm1092 = vcmp.ge.s32.totalorder %v1048, 16
    %vm1093 = vcmp.ge.s32.totalorder %v1049, 16
    %1094 = vrot.lane.b32.xlu0 %v1080, 1
    %v1095 = vpop.permute.xlu0 %1094
    %1096 = vrot.lane.b32.xlu0 %v1081, 1
    %v1097 = vpop.permute.xlu0 %1096
    %vm1098 = vcmp.lt.s32.totalorder %v1048, 1
    %v1099 = vsel %vm1098, %v1095, %v1097
    %v1100 = vsel %vm1098, %v1097, %v1095
    %1102 = vset.pattern.permute.xlu0 3
    %1103 = vperm.xlu0 %1102, %v48
    %v1104 = vpop.permute.xlu0 %1103
    %v1106 = vmul.f32 %v1100, %v1104
    %v1107 = vmul.f32 %v1099, %v1104
    %1108 = vset.pattern.permute.xlu0 4
    %1109 = vperm.xlu0 %1108, %v48
    %v1110 = vpop.permute.xlu0 %1109
    %v1112 = vmul.f32 %v1045, %v1110
    %v1113 = vmul.f32 %v1046, %v1110
    %v1114 = vadd.f32 %v1106, %v1112
    %v1115 = vadd.f32 %v1107, %v1113
    %1116 = vrot.lane.b32.xlu0 %v1088, 127
    %v1117 = vpop.permute.xlu0 %1116
    %1118 = vrot.lane.b32.xlu0 %v1089, 127
    %v1119 = vpop.permute.xlu0 %1118
    %vm1120 = vcmp.lt.s32.totalorder %v1048, 127
    %v1121 = vsel %vm1120, %v1117, %v1119
    %v1122 = vsel %vm1120, %v1119, %v1117
    %1123 = vset.pattern.permute.xlu0 5
    %1124 = vperm.xlu0 %1123, %v48
    %v1125 = vpop.permute.xlu0 %1124
    %v1127 = vmul.f32 %v1121, %v1125
    %v1128 = vmul.f32 %v1122, %v1125
    %v1129 = vadd.f32 %v1114, %v1127
    %v1130 = vadd.f32 %v1115, %v1128
    %1131 = vrot.lane.b32.xlu0 %v1080, 113
    %v1132 = vpop.permute.xlu0 %1131
    %1133 = vrot.lane.b32.xlu0 %v1081, 113
    %v1134 = vpop.permute.xlu0 %1133
    %vm1135 = vcmp.lt.s32.totalorder %v1048, 113
    %v1136 = vsel %vm1135, %v1132, %v1134
    %v1137 = vsel %vm1135, %v1134, %v1132
    %1138 = vset.pattern.permute.xlu0 6
    %1139 = vperm.xlu0 %1138, %v48
    %v1140 = vpop.permute.xlu0 %1139
    %v1142 = vmul.f32 %v1136, %v1140
    %v1143 = vmul.f32 %v1137, %v1140
    %1144 = vrot.lane.b32.xlu0 %v1045, 112
    %v1145 = vpop.permute.xlu0 %1144
    %1146 = vrot.lane.b32.xlu0 %v1046, 112
    %v1147 = vpop.permute.xlu0 %1146
    %vm1148 = vcmp.lt.s32.totalorder %v1048, 112
    %v1149 = vsel %vm1148, %v1145, %v1147
    %v1150 = vsel %vm1148, %v1147, %v1145
    %1151 = vset.pattern.permute.xlu0 7
    %1152 = vperm.xlu0 %1151, %v48
    %v1153 = vpop.permute.xlu0 %1152
    %v1155 = vmul.f32 %v1149, %v1153
    %v1156 = vmul.f32 %v1150, %v1153
    %v1157 = vadd.f32 %v1142, %v1155
    %v1158 = vadd.f32 %v1143, %v1156
    %1159 = vrot.lane.b32.xlu0 %v1088, 111
    %v1160 = vpop.permute.xlu0 %1159
    %1161 = vrot.lane.b32.xlu0 %v1089, 111
    %v1162 = vpop.permute.xlu0 %1161
    %vm1163 = vcmp.lt.s32.totalorder %v1048, 111
    %v1164 = vsel %vm1163, %v1160, %v1162
    %v1165 = vsel %vm1163, %v1162, %v1160
    %1166 = vset.pattern.permute.xlu0 8
    %1167 = vperm.xlu0 %1166, %v48
    %v1168 = vpop.permute.xlu0 %1167
    %v1170 = vmul.f32 %v1164, %v1168
    %v1171 = vmul.f32 %v1165, %v1168
    %v1172 = vadd.f32 %v1157, %v1170
    %v1173 = vadd.f32 %v1158, %v1171
    %v1174 = vsel %vm1090, 1, 0
    %v1175 = vsel %vm1091, 1, 0
    %vm1176 = vcmp.eq.s32.totalorder %v1174, 1
    %vm1177 = vcmp.eq.s32.totalorder %v1175, 1
    %v1178 = vsel %vm1176, %v1172, 0.0
    %v1179 = vsel %vm1177, %v1173, 0.0
    %v1180 = vadd.f32 %v1129, %v1178
    %v1181 = vadd.f32 %v1130, %v1179
    %1182 = vrot.lane.b32.xlu0 %v1080, 17
    %v1183 = vpop.permute.xlu0 %1182
    %1184 = vrot.lane.b32.xlu0 %v1081, 17
    %v1185 = vpop.permute.xlu0 %1184
    %vm1186 = vcmp.lt.s32.totalorder %v1048, 17
    %v1187 = vsel %vm1186, %v1183, %v1185
    %v1188 = vsel %vm1186, %v1185, %v1183
    %1189 = vset.pattern.permute.xlu0 0
    %1190 = vperm.xlu0 %1189, %v48
    %v1191 = vpop.permute.xlu0 %1190
    %v1193 = vmul.f32 %v1188, %v1191
    %v1194 = vmul.f32 %v1187, %v1191
    %1195 = vrot.lane.b32.xlu0 %v1045, 16
    %v1196 = vpop.permute.xlu0 %1195
    %1197 = vrot.lane.b32.xlu0 %v1046, 16
    %v1198 = vpop.permute.xlu0 %1197
    %vm1199 = vcmp.lt.s32.totalorder %v1048, 16
    %v1200 = vsel %vm1199, %v1196, %v1198
    %v1201 = vsel %vm1199, %v1198, %v1196
    %1202 = vset.pattern.permute.xlu0 1
    %1203 = vperm.xlu0 %1202, %v48
    %v1204 = vpop.permute.xlu0 %1203
    %v1206 = vmul.f32 %v1201, %v1204
    %v1207 = vmul.f32 %v1200, %v1204
    %v1208 = vadd.f32 %v1193, %v1206
    %v1209 = vadd.f32 %v1194, %v1207
    %1210 = vrot.lane.b32.xlu0 %v1088, 15
    %v1211 = vpop.permute.xlu0 %1210
    %1212 = vrot.lane.b32.xlu0 %v1089, 15
    %v1213 = vpop.permute.xlu0 %1212
    %vm1214 = vcmp.lt.s32.totalorder %v1048, 15
    %v1215 = vsel %vm1214, %v1211, %v1213
    %v1216 = vsel %vm1214, %v1213, %v1211
    %1217 = vset.pattern.permute.xlu0 2
    %1218 = vperm.xlu0 %1217, %v48
    %v1219 = vpop.permute.xlu0 %1218
    %v1221 = vmul.f32 %v1216, %v1219
    %v1222 = vmul.f32 %v1215, %v1219
    %v1223 = vadd.f32 %v1208, %v1221
    %v1224 = vadd.f32 %v1209, %v1222
    %v1225 = vsel %vm1092, 1, 0
    %v1226 = vsel %vm1093, 1, 0
    %vm1227 = vcmp.eq.s32.totalorder %v1225, 1
    %vm1228 = vcmp.eq.s32.totalorder %v1226, 1
    %v1229 = vsel %vm1227, %v1223, 0.0
    %v1230 = vsel %vm1228, %v1224, 0.0
    %v1231 = vadd.f32 %v1180, %v1229
    %v1232 = vadd.f32 %v1181, %v1230
    %1234 = vset.pattern.permute.xlu0 0
    %1235 = vperm.xlu0 %1234, %v50
    %v1236 = vpop.permute.xlu0 %1235
    %vm1238 = vcmask 64512
    %v1240 = vsel %vm1238, %v47, 0
    %v1242 = vand.u32 %v1232, 4294901760
    %1243 = vmatprep.subr.mxu0 %v1242
    %v1244 = vand.u32 %v1231, 4294901760
    %1245 = vmatpush1.msra.mxu0 %v1244
    %1246 = vmatprep.subr.mxu0 0.0
    %1247 = vmatpush1.msra.mxu0 0.0
    %1248 = vmatprep.subr.mxu0 0.0
    %1249 = vmatpush1.msra.mxu0 0.0
    %1250 = vmatprep.subr.mxu0 0.0
    %1251 = vmatpush1.msra.mxu0 0.0
    %1252 = vmatprep.subr.mxu0 0.0
    %1253 = vmatpush1.msra.mxu0 0.0
    %1254 = vmatprep.subr.mxu0 0.0
    %1255 = vmatpush1.msra.mxu0 0.0
    %1256 = vmatprep.subr.mxu0 0.0
    %1257 = vmatpush1.msra.mxu0 0.0
    %1258 = vmatprep.subr.mxu0 0.0
    %1259 = vmatpush1.msra.mxu0 0.0
    %1260 = vmatprep.subr.mxu0 0.0
    %1261 = vmatpush1.msra.mxu0 0.0
    %1262 = vmatprep.subr.mxu0 0.0
    %1263 = vmatpush1.msra.mxu0 0.0
    %1264 = vmatprep.subr.mxu0 0.0
    %1265 = vmatpush1.msra.mxu0 0.0
    %1266 = vmatprep.subr.mxu0 0.0
    %1267 = vmatpush1.msra.mxu0 0.0
    %1268 = vmatprep.subr.mxu0 0.0
    %1269 = vmatpush1.msra.mxu0 0.0
    %1270 = vmatprep.subr.mxu0 0.0
    %1271 = vmatpush1.msra.mxu0 0.0
    %1272 = vmatprep.subr.mxu0 0.0
    %1273 = vmatpush1.msra.mxu0 0.0
    %1274 = vmatprep.subr.mxu0 0.0
    %1275 = vmatpush1.msra.mxu0 0.0
    %1276 = vmatprep.subr.mxu0 0.0
    %1277 = vmatpush1.msra.mxu0 0.0
    %1278 = vmatprep.subr.mxu0 0.0
    %1279 = vmatpush1.msra.mxu0 0.0
    %1280 = vmatprep.subr.mxu0 0.0
    %1281 = vmatpush1.msra.mxu0 0.0
    %1282 = vmatprep.subr.mxu0 0.0
    %1283 = vmatpush1.msra.mxu0 0.0
    %1284 = vmatprep.subr.mxu0 0.0
    %1285 = vmatpush1.msra.mxu0 0.0
    %1286 = vmatprep.subr.mxu0 0.0
    %1287 = vmatpush1.msra.mxu0 0.0
    %1288 = vmatprep.subr.mxu0 0.0
    %1289 = vmatpush1.msra.mxu0 0.0
    %1290 = vmatprep.subr.mxu0 0.0
    %1291 = vmatpush1.msra.mxu0 0.0
    %1292 = vmatprep.subr.mxu0 0.0
    %1293 = vmatpush1.msra.mxu0 0.0
    %1294 = vmatprep.subr.mxu0 0.0
    %1295 = vmatpush1.msra.mxu0 0.0
    %1296 = vmatprep.subr.mxu0 0.0
    %1297 = vmatpush1.msra.mxu0 0.0
    %1298 = vmatprep.subr.mxu0 0.0
    %1299 = vmatpush1.msra.mxu0 0.0
    %1300 = vmatprep.subr.mxu0 0.0
    %1301 = vmatpush1.msra.mxu0 0.0
    %1302 = vmatprep.subr.mxu0 0.0
    %1303 = vmatpush1.msra.mxu0 0.0
    %1304 = vmatprep.subr.mxu0 0.0
    %1305 = vmatpush1.msra.mxu0 0.0
    %1306 = vmatprep.subr.mxu0 0.0
    %1307 = vmatpush1.msra.mxu0 0.0
    %1308 = vmatprep.mubr.f32.mxu0 0.0
    %v1309 = vand.u32 %v1240, 4294901760
    %v1310 = vsub.f32 %v1240, %v1309
    %v1311 = vand.u32 %v1310, 4294901760
    %v1312 = vsub.f32 %v1310, %v1311
    %v1313 = vand.u32 %v1312, 4294901760
    %1314 = vmatmul.mubr.f32.gmra.mrb[0].mxu0 %v1313
    %v1315 = vpop.f32.mrb[0].mxu0
    %v1316 = vadd.f32 %v1236, %v1315
    %v1317 = vpop.f32.mrb[0].mxu0
    %v1318 = vadd.f32 %v1236, %v1317
    %1319 = vdwg.mxu0
    %v1320 = vand.u32 %v1232, 4294901760
    %v1321 = vsub.f32 %v1232, %v1320
    %v1322 = vand.u32 %v1321, 4294901760
    %v1323 = vsub.f32 %v1321, %v1322
    %v1324 = vand.u32 %v1323, 4294901760
    %1325 = vmatprep.subr.mxu0 %v1324
    %v1326 = vand.u32 %v1231, 4294901760
    %v1327 = vsub.f32 %v1231, %v1326
    %v1328 = vand.u32 %v1327, 4294901760
    %v1329 = vsub.f32 %v1327, %v1328
    %v1330 = vand.u32 %v1329, 4294901760
    %1331 = vmatpush1.msra.mxu0 %v1330
    %1332 = vmatprep.subr.mxu0 0.0
    %1333 = vmatpush1.msra.mxu0 0.0
    %1334 = vmatprep.subr.mxu0 0.0
    %1335 = vmatpush1.msra.mxu0 0.0
    %1336 = vmatprep.subr.mxu0 0.0
    %1337 = vmatpush1.msra.mxu0 0.0
    %1338 = vmatprep.subr.mxu0 0.0
    %1339 = vmatpush1.msra.mxu0 0.0
    %1340 = vmatprep.subr.mxu0 0.0
    %1341 = vmatpush1.msra.mxu0 0.0
    %1342 = vmatprep.subr.mxu0 0.0
    %1343 = vmatpush1.msra.mxu0 0.0
    %1344 = vmatprep.subr.mxu0 0.0
    %1345 = vmatpush1.msra.mxu0 0.0
    %1346 = vmatprep.subr.mxu0 0.0
    %1347 = vmatpush1.msra.mxu0 0.0
    %1348 = vmatprep.subr.mxu0 0.0
    %1349 = vmatpush1.msra.mxu0 0.0
    %1350 = vmatprep.subr.mxu0 0.0
    %1351 = vmatpush1.msra.mxu0 0.0
    %1352 = vmatprep.subr.mxu0 0.0
    %1353 = vmatpush1.msra.mxu0 0.0
    %1354 = vmatprep.subr.mxu0 0.0
    %1355 = vmatpush1.msra.mxu0 0.0
    %1356 = vmatprep.subr.mxu0 0.0
    %1357 = vmatpush1.msra.mxu0 0.0
    %1358 = vmatprep.subr.mxu0 0.0
    %1359 = vmatpush1.msra.mxu0 0.0
    %1360 = vmatprep.subr.mxu0 0.0
    %1361 = vmatpush1.msra.mxu0 0.0
    %1362 = vmatprep.subr.mxu0 0.0
    %1363 = vmatpush1.msra.mxu0 0.0
    %1364 = vmatprep.subr.mxu0 0.0
    %1365 = vmatpush1.msra.mxu0 0.0
    %1366 = vmatprep.subr.mxu0 0.0
    %1367 = vmatpush1.msra.mxu0 0.0
    %1368 = vmatprep.subr.mxu0 0.0
    %1369 = vmatpush1.msra.mxu0 0.0
    %1370 = vmatprep.subr.mxu0 0.0
    %1371 = vmatpush1.msra.mxu0 0.0
    %1372 = vmatprep.subr.mxu0 0.0
    %1373 = vmatpush1.msra.mxu0 0.0
    %1374 = vmatprep.subr.mxu0 0.0
    %1375 = vmatpush1.msra.mxu0 0.0
    %1376 = vmatprep.subr.mxu0 0.0
    %1377 = vmatpush1.msra.mxu0 0.0
    %1378 = vmatprep.subr.mxu0 0.0
    %1379 = vmatpush1.msra.mxu0 0.0
    %1380 = vmatprep.subr.mxu0 0.0
    %1381 = vmatpush1.msra.mxu0 0.0
    %1382 = vmatprep.subr.mxu0 0.0
    %1383 = vmatpush1.msra.mxu0 0.0
    %1384 = vmatprep.subr.mxu0 0.0
    %1385 = vmatpush1.msra.mxu0 0.0
    %1386 = vmatprep.subr.mxu0 0.0
    %1387 = vmatpush1.msra.mxu0 0.0
    %1388 = vmatprep.subr.mxu0 0.0
    %1389 = vmatpush1.msra.mxu0 0.0
    %1390 = vmatprep.subr.mxu0 0.0
    %1391 = vmatpush1.msra.mxu0 0.0
    %1392 = vmatprep.subr.mxu0 0.0
    %1393 = vmatpush1.msra.mxu0 0.0
    %1394 = vmatprep.mubr.f32.mxu0 0.0
    %v1395 = vand.u32 %v1240, 4294901760
    %1396 = vmatmul.mubr.f32.gmra.mrb[0].mxu0 %v1395
    %v1397 = vpop.f32.mrb[0].mxu0
    %v1398 = vadd.f32 %v1316, %v1397
    %v1399 = vpop.f32.mrb[0].mxu0
    %v1400 = vadd.f32 %v1318, %v1399
    %1401 = vdwg.mxu0
    %v1402 = vand.u32 %v1232, 4294901760
    %v1403 = vsub.f32 %v1232, %v1402
    %1404 = vmatprep.subr.mxu0 %v1403
    %v1405 = vand.u32 %v1231, 4294901760
    %v1406 = vsub.f32 %v1231, %v1405
    %1407 = vmatpush1.msra.mxu0 %v1406
    %1408 = vmatprep.subr.mxu0 0.0
    %1409 = vmatpush1.msra.mxu0 0.0
    %1410 = vmatprep.subr.mxu0 0.0
    %1411 = vmatpush1.msra.mxu0 0.0
    %1412 = vmatprep.subr.mxu0 0.0
    %1413 = vmatpush1.msra.mxu0 0.0
    %1414 = vmatprep.subr.mxu0 0.0
    %1415 = vmatpush1.msra.mxu0 0.0
    %1416 = vmatprep.subr.mxu0 0.0
    %1417 = vmatpush1.msra.mxu0 0.0
    %1418 = vmatprep.subr.mxu0 0.0
    %1419 = vmatpush1.msra.mxu0 0.0
    %1420 = vmatprep.subr.mxu0 0.0
    %1421 = vmatpush1.msra.mxu0 0.0
    %1422 = vmatprep.subr.mxu0 0.0
    %1423 = vmatpush1.msra.mxu0 0.0
    %1424 = vmatprep.subr.mxu0 0.0
    %1425 = vmatpush1.msra.mxu0 0.0
    %1426 = vmatprep.subr.mxu0 0.0
    %1427 = vmatpush1.msra.mxu0 0.0
    %1428 = vmatprep.subr.mxu0 0.0
    %1429 = vmatpush1.msra.mxu0 0.0
    %1430 = vmatprep.subr.mxu0 0.0
    %1431 = vmatpush1.msra.mxu0 0.0
    %1432 = vmatprep.subr.mxu0 0.0
    %1433 = vmatpush1.msra.mxu0 0.0
    %1434 = vmatprep.subr.mxu0 0.0
    %1435 = vmatpush1.msra.mxu0 0.0
    %1436 = vmatprep.subr.mxu0 0.0
    %1437 = vmatpush1.msra.mxu0 0.0
    %1438 = vmatprep.subr.mxu0 0.0
    %1439 = vmatpush1.msra.mxu0 0.0
    %1440 = vmatprep.subr.mxu0 0.0
    %1441 = vmatpush1.msra.mxu0 0.0
    %1442 = vmatprep.subr.mxu0 0.0
    %1443 = vmatpush1.msra.mxu0 0.0
    %1444 = vmatprep.subr.mxu0 0.0
    %1445 = vmatpush1.msra.mxu0 0.0
    %1446 = vmatprep.subr.mxu0 0.0
    %1447 = vmatpush1.msra.mxu0 0.0
    %1448 = vmatprep.subr.mxu0 0.0
    %1449 = vmatpush1.msra.mxu0 0.0
    %1450 = vmatprep.subr.mxu0 0.0
    %1451 = vmatpush1.msra.mxu0 0.0
    %1452 = vmatprep.subr.mxu0 0.0
    %1453 = vmatpush1.msra.mxu0 0.0
    %1454 = vmatprep.subr.mxu0 0.0
    %1455 = vmatpush1.msra.mxu0 0.0
    %1456 = vmatprep.subr.mxu0 0.0
    %1457 = vmatpush1.msra.mxu0 0.0
    %1458 = vmatprep.subr.mxu0 0.0
    %1459 = vmatpush1.msra.mxu0 0.0
    %1460 = vmatprep.subr.mxu0 0.0
    %1461 = vmatpush1.msra.mxu0 0.0
    %1462 = vmatprep.subr.mxu0 0.0
    %1463 = vmatpush1.msra.mxu0 0.0
    %1464 = vmatprep.subr.mxu0 0.0
    %1465 = vmatpush1.msra.mxu0 0.0
    %1466 = vmatprep.subr.mxu0 0.0
    %1467 = vmatpush1.msra.mxu0 0.0
    %1468 = vmatprep.subr.mxu0 0.0
    %1469 = vmatpush1.msra.mxu0 0.0
    %1470 = vmatprep.mubr.f32.mxu0 0.0
    %v1471 = vand.u32 %v1240, 4294901760
    %v1472 = vsub.f32 %v1240, %v1471
    %1473 = vmatmul.mubr.f32.gmra.mrb[0].mxu0 %v1472
    %v1474 = vpop.f32.mrb[0].mxu0
    %v1475 = vadd.f32 %v1398, %v1474
    %v1476 = vpop.f32.mrb[0].mxu0
    %v1477 = vadd.f32 %v1400, %v1476
    %1478 = vdwg.mxu0
    %v1479 = vand.u32 %v1232, 4294901760
    %1480 = vmatprep.subr.mxu0 %v1479
    %v1481 = vand.u32 %v1231, 4294901760
    %1482 = vmatpush1.msra.mxu0 %v1481
    %1483 = vmatprep.subr.mxu0 0.0
    %1484 = vmatpush1.msra.mxu0 0.0
    %1485 = vmatprep.subr.mxu0 0.0
    %1486 = vmatpush1.msra.mxu0 0.0
    %1487 = vmatprep.subr.mxu0 0.0
    %1488 = vmatpush1.msra.mxu0 0.0
    %1489 = vmatprep.subr.mxu0 0.0
    %1490 = vmatpush1.msra.mxu0 0.0
    %1491 = vmatprep.subr.mxu0 0.0
    %1492 = vmatpush1.msra.mxu0 0.0
    %1493 = vmatprep.subr.mxu0 0.0
    %1494 = vmatpush1.msra.mxu0 0.0
    %1495 = vmatprep.subr.mxu0 0.0
    %1496 = vmatpush1.msra.mxu0 0.0
    %1497 = vmatprep.subr.mxu0 0.0
    %1498 = vmatpush1.msra.mxu0 0.0
    %1499 = vmatprep.subr.mxu0 0.0
    %1500 = vmatpush1.msra.mxu0 0.0
    %1501 = vmatprep.subr.mxu0 0.0
    %1502 = vmatpush1.msra.mxu0 0.0
    %1503 = vmatprep.subr.mxu0 0.0
    %1504 = vmatpush1.msra.mxu0 0.0
    %1505 = vmatprep.subr.mxu0 0.0
    %1506 = vmatpush1.msra.mxu0 0.0
    %1507 = vmatprep.subr.mxu0 0.0
    %1508 = vmatpush1.msra.mxu0 0.0
    %1509 = vmatprep.subr.mxu0 0.0
    %1510 = vmatpush1.msra.mxu0 0.0
    %1511 = vmatprep.subr.mxu0 0.0
    %1512 = vmatpush1.msra.mxu0 0.0
    %1513 = vmatprep.subr.mxu0 0.0
    %1514 = vmatpush1.msra.mxu0 0.0
    %1515 = vmatprep.subr.mxu0 0.0
    %1516 = vmatpush1.msra.mxu0 0.0
    %1517 = vmatprep.subr.mxu0 0.0
    %1518 = vmatpush1.msra.mxu0 0.0
    %1519 = vmatprep.subr.mxu0 0.0
    %1520 = vmatpush1.msra.mxu0 0.0
    %1521 = vmatprep.subr.mxu0 0.0
    %1522 = vmatpush1.msra.mxu0 0.0
    %1523 = vmatprep.subr.mxu0 0.0
    %1524 = vmatpush1.msra.mxu0 0.0
    %1525 = vmatprep.subr.mxu0 0.0
    %1526 = vmatpush1.msra.mxu0 0.0
    %1527 = vmatprep.subr.mxu0 0.0
    %1528 = vmatpush1.msra.mxu0 0.0
    %1529 = vmatprep.subr.mxu0 0.0
    %1530 = vmatpush1.msra.mxu0 0.0
    %1531 = vmatprep.subr.mxu0 0.0
    %1532 = vmatpush1.msra.mxu0 0.0
    %1533 = vmatprep.subr.mxu0 0.0
    %1534 = vmatpush1.msra.mxu0 0.0
    %1535 = vmatprep.subr.mxu0 0.0
    %1536 = vmatpush1.msra.mxu0 0.0
    %1537 = vmatprep.subr.mxu0 0.0
    %1538 = vmatpush1.msra.mxu0 0.0
    %1539 = vmatprep.subr.mxu0 0.0
    %1540 = vmatpush1.msra.mxu0 0.0
    %1541 = vmatprep.subr.mxu0 0.0
    %1542 = vmatpush1.msra.mxu0 0.0
    %1543 = vmatprep.subr.mxu0 0.0
    %1544 = vmatpush1.msra.mxu0 0.0
    %1545 = vmatprep.mubr.f32.mxu0 0.0
    %v1546 = vand.u32 %v1240, 4294901760
    %v1547 = vsub.f32 %v1240, %v1546
    %v1548 = vand.u32 %v1547, 4294901760
    %1549 = vmatmul.mubr.f32.gmra.mrb[0].mxu0 %v1548
    %v1550 = vpop.f32.mrb[0].mxu0
    %v1551 = vadd.f32 %v1475, %v1550
    %v1552 = vpop.f32.mrb[0].mxu0
    %v1553 = vadd.f32 %v1477, %v1552
    %1554 = vdwg.mxu0
    %v1555 = vand.u32 %v1232, 4294901760
    %v1556 = vsub.f32 %v1232, %v1555
    %v1557 = vand.u32 %v1556, 4294901760
    %1558 = vmatprep.subr.mxu0 %v1557
    %v1559 = vand.u32 %v1231, 4294901760
    %v1560 = vsub.f32 %v1231, %v1559
    %v1561 = vand.u32 %v1560, 4294901760
    %1562 = vmatpush1.msra.mxu0 %v1561
    %1563 = vmatprep.subr.mxu0 0.0
    %1564 = vmatpush1.msra.mxu0 0.0
    %1565 = vmatprep.subr.mxu0 0.0
    %1566 = vmatpush1.msra.mxu0 0.0
    %1567 = vmatprep.subr.mxu0 0.0
    %1568 = vmatpush1.msra.mxu0 0.0
    %1569 = vmatprep.subr.mxu0 0.0
    %1570 = vmatpush1.msra.mxu0 0.0
    %1571 = vmatprep.subr.mxu0 0.0
    %1572 = vmatpush1.msra.mxu0 0.0
    %1573 = vmatprep.subr.mxu0 0.0
    %1574 = vmatpush1.msra.mxu0 0.0
    %1575 = vmatprep.subr.mxu0 0.0
    %1576 = vmatpush1.msra.mxu0 0.0
    %1577 = vmatprep.subr.mxu0 0.0
    %1578 = vmatpush1.msra.mxu0 0.0
    %1579 = vmatprep.subr.mxu0 0.0
    %1580 = vmatpush1.msra.mxu0 0.0
    %1581 = vmatprep.subr.mxu0 0.0
    %1582 = vmatpush1.msra.mxu0 0.0
    %1583 = vmatprep.subr.mxu0 0.0
    %1584 = vmatpush1.msra.mxu0 0.0
    %1585 = vmatprep.subr.mxu0 0.0
    %1586 = vmatpush1.msra.mxu0 0.0
    %1587 = vmatprep.subr.mxu0 0.0
    %1588 = vmatpush1.msra.mxu0 0.0
    %1589 = vmatprep.subr.mxu0 0.0
    %1590 = vmatpush1.msra.mxu0 0.0
    %1591 = vmatprep.subr.mxu0 0.0
    %1592 = vmatpush1.msra.mxu0 0.0
    %1593 = vmatprep.subr.mxu0 0.0
    %1594 = vmatpush1.msra.mxu0 0.0
    %1595 = vmatprep.subr.mxu0 0.0
    %1596 = vmatpush1.msra.mxu0 0.0
    %1597 = vmatprep.subr.mxu0 0.0
    %1598 = vmatpush1.msra.mxu0 0.0
    %1599 = vmatprep.subr.mxu0 0.0
    %1600 = vmatpush1.msra.mxu0 0.0
    %1601 = vmatprep.subr.mxu0 0.0
    %1602 = vmatpush1.msra.mxu0 0.0
    %1603 = vmatprep.subr.mxu0 0.0
    %1604 = vmatpush1.msra.mxu0 0.0
    %1605 = vmatprep.subr.mxu0 0.0
    %1606 = vmatpush1.msra.mxu0 0.0
    %1607 = vmatprep.subr.mxu0 0.0
    %1608 = vmatpush1.msra.mxu0 0.0
    %1609 = vmatprep.subr.mxu0 0.0
    %1610 = vmatpush1.msra.mxu0 0.0
    %1611 = vmatprep.subr.mxu0 0.0
    %1612 = vmatpush1.msra.mxu0 0.0
    %1613 = vmatprep.subr.mxu0 0.0
    %1614 = vmatpush1.msra.mxu0 0.0
    %1615 = vmatprep.subr.mxu0 0.0
    %1616 = vmatpush1.msra.mxu0 0.0
    %1617 = vmatprep.subr.mxu0 0.0
    %1618 = vmatpush1.msra.mxu0 0.0
    %1619 = vmatprep.subr.mxu0 0.0
    %1620 = vmatpush1.msra.mxu0 0.0
    %1621 = vmatprep.subr.mxu0 0.0
    %1622 = vmatpush1.msra.mxu0 0.0
    %1623 = vmatprep.subr.mxu0 0.0
    %1624 = vmatpush1.msra.mxu0 0.0
    %1625 = vmatprep.mubr.f32.mxu0 0.0
    %v1626 = vand.u32 %v1240, 4294901760
    %1627 = vmatmul.mubr.f32.gmra.mrb[0].mxu0 %v1626
    %v1628 = vpop.f32.mrb[0].mxu0
    %v1629 = vadd.f32 %v1551, %v1628
    %v1630 = vpop.f32.mrb[0].mxu0
    %v1631 = vadd.f32 %v1553, %v1630
    %1632 = vdwg.mxu0
    %v1633 = vand.u32 %v1232, 4294901760
    %1634 = vmatprep.subr.mxu0 %v1633
    %v1635 = vand.u32 %v1231, 4294901760
    %1636 = vmatpush1.msra.mxu0 %v1635
    %1637 = vmatprep.subr.mxu0 0.0
    %1638 = vmatpush1.msra.mxu0 0.0
    %1639 = vmatprep.subr.mxu0 0.0
    %1640 = vmatpush1.msra.mxu0 0.0
    %1641 = vmatprep.subr.mxu0 0.0
    %1642 = vmatpush1.msra.mxu0 0.0
    %1643 = vmatprep.subr.mxu0 0.0
    %1644 = vmatpush1.msra.mxu0 0.0
    %1645 = vmatprep.subr.mxu0 0.0
    %1646 = vmatpush1.msra.mxu0 0.0
    %1647 = vmatprep.subr.mxu0 0.0
    %1648 = vmatpush1.msra.mxu0 0.0
    %1649 = vmatprep.subr.mxu0 0.0
    %1650 = vmatpush1.msra.mxu0 0.0
    %1651 = vmatprep.subr.mxu0 0.0
    %1652 = vmatpush1.msra.mxu0 0.0
    %1653 = vmatprep.subr.mxu0 0.0
    %1654 = vmatpush1.msra.mxu0 0.0
    %1655 = vmatprep.subr.mxu0 0.0
    %1656 = vmatpush1.msra.mxu0 0.0
    %1657 = vmatprep.subr.mxu0 0.0
    %1658 = vmatpush1.msra.mxu0 0.0
    %1659 = vmatprep.subr.mxu0 0.0
    %1660 = vmatpush1.msra.mxu0 0.0
    %1661 = vmatprep.subr.mxu0 0.0
    %1662 = vmatpush1.msra.mxu0 0.0
    %1663 = vmatprep.subr.mxu0 0.0
    %1664 = vmatpush1.msra.mxu0 0.0
    %1665 = vmatprep.subr.mxu0 0.0
    %1666 = vmatpush1.msra.mxu0 0.0
    %1667 = vmatprep.subr.mxu0 0.0
    %1668 = vmatpush1.msra.mxu0 0.0
    %1669 = vmatprep.subr.mxu0 0.0
    %1670 = vmatpush1.msra.mxu0 0.0
    %1671 = vmatprep.subr.mxu0 0.0
    %1672 = vmatpush1.msra.mxu0 0.0
    %1673 = vmatprep.subr.mxu0 0.0
    %1674 = vmatpush1.msra.mxu0 0.0
    %1675 = vmatprep.subr.mxu0 0.0
    %1676 = vmatpush1.msra.mxu0 0.0
    %1677 = vmatprep.subr.mxu0 0.0
    %1678 = vmatpush1.msra.mxu0 0.0
    %1679 = vmatprep.subr.mxu0 0.0
    %1680 = vmatpush1.msra.mxu0 0.0
    %1681 = vmatprep.subr.mxu0 0.0
    %1682 = vmatpush1.msra.mxu0 0.0
    %1683 = vmatprep.subr.mxu0 0.0
    %1684 = vmatpush1.msra.mxu0 0.0
    %1685 = vmatprep.subr.mxu0 0.0
    %1686 = vmatpush1.msra.mxu0 0.0
    %1687 = vmatprep.subr.mxu0 0.0
    %1688 = vmatpush1.msra.mxu0 0.0
    %1689 = vmatprep.subr.mxu0 0.0
    %1690 = vmatpush1.msra.mxu0 0.0
    %1691 = vmatprep.subr.mxu0 0.0
    %1692 = vmatpush1.msra.mxu0 0.0
    %1693 = vmatprep.subr.mxu0 0.0
    %1694 = vmatpush1.msra.mxu0 0.0
    %1695 = vmatprep.subr.mxu0 0.0
    %1696 = vmatpush1.msra.mxu0 0.0
    %1697 = vmatprep.subr.mxu0 0.0
    %1698 = vmatpush1.msra.mxu0 0.0
    %1699 = vmatprep.mubr.f32.mxu0 0.0
    %v1700 = vand.u32 %v1240, 4294901760
    %1701 = vmatmul.mubr.f32.gmra.mrb[0].mxu0 %v1700
    %v1702 = vpop.f32.mrb[0].mxu0
    %v1703 = vadd.f32 %v1629, %v1702
    %v1704 = vpop.f32.mrb[0].mxu0
    %v1705 = vadd.f32 %v1631, %v1704
    %1706 = vdwg.mxu0
    %v1707 = vmax.f32 %v1703, 0.0
    %v1708 = vmax.f32 %v1705, 0.0
    %1709 = vst [vmem:[#allocation5] sm:$0xff] %v542
    %1710 = vst [vmem:[#allocation5 + $0x8] sm:$0xff] %v544
    %1711 = vst [vmem:[#allocation5 + $0x10] sm:$0xff] %v1707
    %1712 = vst [vmem:[#allocation5 + $0x18] sm:$0xff] %v1708
    // Predicated region
    $region34: #{tpu_custom_call.1} parent=1 // pred_check
      _
    $region35: #{tpu_custom_call.1} parent=1 // pred_check_branch
      %1714 = sbr.rel (0) target = $region37
    $region36: #{tpu_custom_call.1} parent=1 // pred_region
      %s1716 = ssub.s32 512, 512
      %1717 = vsyncadd [#allocation4], %s1716
      %s1719 = sshll.u32 [#allocation5], 4
      %s1720 = int_to_ptr.vmem [resolvable:$true] %s1719
      %1722 = dma.vmem_to_hbm [thread:$0]  %s1720, 512, %s7, [#allocation4]
    $region37: #{tpu_custom_call.1} parent=1 // pred_fallthru
      _
    // Predicated region
    $region38: #{tpu_custom_call.1} parent=1 // pred_check
      _
    $region39: #{tpu_custom_call.1} parent=1 // pred_check_branch
      %1724 = sbr.rel (0) target = $region41
    $region40: #{tpu_custom_call.1} parent=1 // pred_region
      %1725 = dma.done [#allocation4], 512
    $region41: #{tpu_custom_call.1} parent=1 // pred_fallthru
      _
    %1726 = vsyncpa [#allocation3], 1
    %1727 = vsyncpa [#allocation4], 1

</llo_original>
